<compile_context>
chip_gen: v5e
topology: v5e:2x2
jax: 0.10.0
libtpu: 0.0.40
codegen_flags: <defaults>
</compile_context>

<pallas_src>
import functools

import jax
import jax.numpy as jnp
from jax.experimental import pallas as pl
from jax.experimental.pallas import tpu as pltpu


def _round_up(n: int, m: int) -> int:
    return ((n + m - 1) // m) * m


def smallmodel_kernel(x_ref, w1_ref, b1_ref, w2_ref, b2_ref, o_ref):
    # x_ref:  (Bp, D_in)  f32   (activations kept in f32 for parity; tiny DMA)
    # w1_ref: (D_in, H)   bf16  (halves the dominant HBM DMA; upcast in-kernel)
    # b1_ref: (1, H)      f32
    # w2_ref: (H, Cp)     bf16  (zero-padded columns to 128 lanes)
    # b2_ref: (1, Cp)     f32   (zero-padded columns)
    # o_ref:  (Bp, Cp)    f32
    w1 = w1_ref[...].astype(jnp.float32)           # free: kernel is DMA-bound
    h = jnp.dot(x_ref[...], w1, preferred_element_type=jnp.float32)
    h = jnp.maximum(h + b1_ref[...], 0.0)          # bias + ReLU in f32
    w2 = w2_ref[...].astype(jnp.float32)
    o = jnp.dot(h, w2, preferred_element_type=jnp.float32) + b2_ref[...]
    o_ref[...] = o


def prepare_params(w1, b1, w2, b2):
    """One-time (parameter-load-time) cast/pad of the weights.

    Returns device-resident params ready for `small_model_forward`. Doing this
    once keeps the per-call path free of convert/pad launches.
    """
    d_in, h = w1.shape
    c = w2.shape[1]
    cp = _round_up(max(c, 128), 128)

    w1_bf = w1.astype(jnp.bfloat16)
    b1_2d = b1.reshape(1, h).astype(jnp.float32)
    w2_pad = jnp.zeros((h, cp), jnp.bfloat16).at[:, :c].set(
        w2.astype(jnp.bfloat16))
    b2_pad = jnp.zeros((1, cp), jnp.float32).at[:, :c].set(
        b2.reshape(1, c).astype(jnp.float32))

    params = tuple(jax.device_put(p) for p in (w1_bf, b1_2d, w2_pad, b2_pad))
    return params, c


@functools.partial(jax.jit, static_argnames=("num_classes",))
def small_model_forward(x_nchw, w1_bf, b1_2d, w2_pad, b2_pad, *, num_classes):
    """x_nchw: (B, C, H, W) f32; params from `prepare_params`.
    Returns logits (B, num_classes) f32 (matches the f32 PyTorch module up to
    bf16 weight rounding)."""
    batch = x_nchw.shape[0]
    x_flat = x_nchw.reshape(batch, -1).astype(jnp.float32)   # x.view(B, -1)
    d_in = x_flat.shape[1]
    hdim = w1_bf.shape[1]
    cp = w2_pad.shape[1]

    # Pad batch (sublane) dim to a multiple of 8 with a single jnp.pad.
    bp = _round_up(max(batch, 8), 8)
    if bp != batch:
        x_flat = jnp.pad(x_flat, ((0, bp - batch), (0, 0)))

    vmem = pl.BlockSpec(memory_space=pltpu.MemorySpace.VMEM)
    cost = pl.CostEstimate(
        flops=2 * bp * d_in * hdim + 2 * bp * hdim * cp,
        transcendentals=0,
        bytes_accessed=(bp * d_in * 4          # x (f32)
                        + d_in * hdim * 2      # w1 (bf16) -- dominant DMA
                        + hdim * 4             # b1
                        + hdim * cp * 2        # w2 (bf16)
                        + cp * 4               # b2
                        + bp * cp * 4),        # out
    )

    out_pad = pl.pallas_call(
        smallmodel_kernel,
        out_shape=jax.ShapeDtypeStruct((bp, cp), jnp.float32),
        in_specs=[vmem, vmem, vmem, vmem, vmem],
        out_specs=vmem,
        cost_estimate=cost,
    )(x_flat, w1_bf, b1_2d, w2_pad, b2_pad)

    return out_pad[:batch, :num_classes]


if __name__ == "__main__":
    # dataset = 'cifar10' -> in_channels=3, input_size=3072, fc: 3072->128->10
    key = jax.random.PRNGKey(0)
    k_x, k_w1, k_b1, k_w2, k_b2 = jax.random.split(key, 5)

    B, Cin, Himg, Wimg = 2, 3, 32, 32
    D_in, Hid, Cout = Cin * Himg * Wimg, 128, 10

    x = jax.random.normal(k_x, (B, Cin, Himg, Wimg), dtype=jnp.float32)

    # nn.Linear-style uniform(-1/sqrt(fan_in), 1/sqrt(fan_in)) init (f32 master).
    lim1 = 1.0 / (D_in ** 0.5)
    lim2 = 1.0 / (Hid ** 0.5)
    w1 = jax.random.uniform(k_w1, (D_in, Hid), jnp.float32, -lim1, lim1)
    b1 = jax.random.uniform(k_b1, (Hid,), jnp.float32, -lim1, lim1)
    w2 = jax.random.uniform(k_w2, (Hid, Cout), jnp.float32, -lim2, lim2)
    b2 = jax.random.uniform(k_b2, (Cout,), jnp.float32, -lim2, lim2)

    # One-time parameter preparation (cast/pad hoisted out of the hot path).
    (w1_bf, b1_2d, w2_pad, b2_pad), num_classes = prepare_params(w1, b1, w2, b2)

    out = small_model_forward(x, w1_bf, b1_2d, w2_pad, b2_pad,
                              num_classes=num_classes)
    out = jax.block_until_ready(out)
    assert out.shape == (B, Cout)

    # Reference 1: same numerics as the kernel (bf16-rounded weights, f32 math).
    x_flat = x.reshape(B, -1)
    ref_h = jnp.maximum(
        x_flat @ w1.astype(jnp.bfloat16).astype(jnp.float32) + b1.reshape(1, -1),
        0.0)
    ref_bfw = ref_h @ w2.astype(jnp.bfloat16).astype(jnp.float32) + b2.reshape(1, -1)
    assert jnp.allclose(out, ref_bfw, atol=1e-2, rtol=1e-2)

    # Reference 2: pure f32 PyTorch-equivalent path (loose tol for bf16 weight
    # rounding).
    ref_f32 = jnp.maximum(x_flat @ w1 + b1, 0.0) @ w2 + b2
    assert jnp.allclose(out, ref_f32, atol=5e-2, rtol=5e-2)

    print("KERNEL_OK")
</pallas_src>

<mosaic_0001>
module attributes {stable_mosaic.version = 11 : i64} {
  func.func @smallmodel_kernel(%arg0: memref<8x3072xf32, #tpu.memory_space<vmem>>, %arg1: memref<3072x128xbf16, #tpu.memory_space<vmem>>, %arg2: memref<1x128xf32, #tpu.memory_space<vmem>>, %arg3: memref<128x128xbf16, #tpu.memory_space<vmem>>, %arg4: memref<1x128xf32, #tpu.memory_space<vmem>>, %arg5: memref<8x128xf32, #tpu.memory_space<vmem>>) attributes {dimension_semantics = [], scalar_prefetch = 0 : i64, scratch_operands = 0 : i64, tpu.core_type = #tpu.core_type<tc>} {
    %c0 = arith.constant 0 : index
    %c0_0 = arith.constant 0 : index
    %0 = vector.load %arg1[%c0, %c0_0] : memref<3072x128xbf16, #tpu.memory_space<vmem>>, vector<3072x128xbf16>
    %1 = arith.extf %0 : vector<3072x128xbf16> to vector<3072x128xf32>
    %c0_1 = arith.constant 0 : index
    %c0_2 = arith.constant 0 : index
    %2 = vector.load %arg0[%c0_1, %c0_2] : memref<8x3072xf32, #tpu.memory_space<vmem>>, vector<8x3072xf32>
    %cst = arith.constant dense<0.000000e+00> : vector<8x128xf32>
    %3 = tpu.matmul %2, %1, %cst {dimension_numbers = #tpu.dot_dimension_numbers<[1], [0], [0], [1], [0, 0, 1, 1], [], []>} : vector<8x3072xf32>, vector<3072x128xf32>, vector<8x128xf32> -> vector<8x128xf32>
    %c0_3 = arith.constant 0 : index
    %c0_4 = arith.constant 0 : index
    %4 = vector.load %arg2[%c0_3, %c0_4] : memref<1x128xf32, #tpu.memory_space<vmem>>, vector<1x128xf32>
    %5 = vector.broadcast %4 : vector<1x128xf32> to vector<8x128xf32>
    %6 = arith.addf %3, %5 : vector<8x128xf32>
    %cst_5 = arith.constant 0.000000e+00 : f32
    %7 = vector.broadcast %cst_5 : f32 to vector<8x128xf32>
    %8 = arith.maximumf %6, %7 : vector<8x128xf32>
    %c0_6 = arith.constant 0 : index
    %c0_7 = arith.constant 0 : index
    %9 = vector.load %arg3[%c0_6, %c0_7] : memref<128x128xbf16, #tpu.memory_space<vmem>>, vector<128x128xbf16>
    %10 = arith.extf %9 : vector<128x128xbf16> to vector<128x128xf32>
    %cst_8 = arith.constant dense<0.000000e+00> : vector<8x128xf32>
    %11 = tpu.matmul %8, %10, %cst_8 {dimension_numbers = #tpu.dot_dimension_numbers<[1], [0], [0], [1], [0, 0, 1, 1], [], []>} : vector<8x128xf32>, vector<128x128xf32>, vector<8x128xf32> -> vector<8x128xf32>
    %c0_9 = arith.constant 0 : index
    %c0_10 = arith.constant 0 : index
    %12 = vector.load %arg4[%c0_9, %c0_10] : memref<1x128xf32, #tpu.memory_space<vmem>>, vector<1x128xf32>
    %13 = vector.broadcast %12 : vector<1x128xf32> to vector<8x128xf32>
    %14 = arith.addf %11, %13 : vector<8x128xf32>
    %c0_11 = arith.constant 0 : index
    %c0_12 = arith.constant 0 : index
    %15 = vector.load %arg5[%c0_11, %c0_12] : memref<8x128xf32, #tpu.memory_space<vmem>>, vector<8x128xf32>
    tpu.vector_store %arg5[%c0_11, %c0_12], %14 {strides = array<i32>} : memref<8x128xf32, #tpu.memory_space<vmem>>, vector<8x128xf32>,
    return
  }
}

</mosaic_0001>

<llo_original>
// kernel: small_model_forward.1
$region0: #{small_model_forward.1}
  #allocation0 [shape = 'u32[]', space=smem, size = 0x4, offset = 0x4, fixed_abs, tag = 'smem constant byte address 0x4 - core index']
  #allocation1 [shape = 'u32[72,128]{1,0:T(1,128)}', space=vmem, size = 0x9000, scoped, tag = 'internal scratch']
  %s0 = inlined_call_operand.vmem [shape: f32[8,3072], index: 0, kind: input, shape index: {}]
  %s1 = inlined_call_operand.hbm [shape: bf16[3072,128], index: 1, kind: input, shape index: {}]
  %s2 = inlined_call_operand.vmem [shape: f32[1,128], index: 2, kind: input, shape index: {}]
  %s3 = inlined_call_operand.vmem [shape: bf16[128,128], index: 3, kind: input, shape index: {}]
  %s4 = inlined_call_operand.vmem [shape: f32[1,128], index: 4, kind: input, shape index: {}]
  %s5 = inlined_call_operand.vmem [shape: f32[8,128], index: 5, kind: output, shape index: {}]
  %s6 = sld [smem:[#allocation0]]
  $region34: #{small_model_forward.1} parent=0
    _
  %s8 = ssub.s32 1, %s6
  %s9 = scalar_select 0, %s8, %s6
  $region1: #{small_model_forward.1} parent=0
    #allocation2 [shape = 'u8[786432]{0}', space=vmem, size = 0xc0000, scoped, tag = 'input window, operand 1, single buffered']
    #allocation3 [shape = 's32[1]{0}', space=sflag, size = 0x4, scoped, tag = 'scoped memory for small_model_forward.1']
    %10 = vsyncpa [#allocation3], 0
    // Predicated region
    $region2: #{small_model_forward.1} parent=1 // pred_check
      _
    $region3: #{small_model_forward.1} parent=1 // pred_check_branch
      %12 = sbr.rel (0) target = $region5
    $region4: #{small_model_forward.1} parent=1 // pred_region
      _
    $region5: #{small_model_forward.1} parent=1 // pred_fallthru
      _
    // Predicated region
    $region6: #{small_model_forward.1} parent=1 // pred_check
      _
    $region7: #{small_model_forward.1} parent=1 // pred_check_branch
      %14 = sbr.rel (0) target = $region9
    $region8: #{small_model_forward.1} parent=1 // pred_region
      %16 = vsyncadd [#allocation3], 0
      %s17 = sshll.u32 %s1, 4
      %s18 = int_to_ptr.hbm [resolvable:$true] %s17
      %s19 = sshll.u32 [#allocation2], 4
      %s20 = int_to_ptr.vmem [resolvable:$true] %s19
      %25 = dma.hbm_to_vmem [thread:$0]  %s18, 24576, %s20, [#allocation3], 64, 64, 4
    $region9: #{small_model_forward.1} parent=1 // pred_fallthru
      _
    // Predicated region
    $region10: #{small_model_forward.1} parent=1 // pred_check
      _
    $region11: #{small_model_forward.1} parent=1 // pred_check_branch
      %27 = sbr.rel (0) target = $region13
    $region12: #{small_model_forward.1} parent=1 // pred_region
      _
    $region13: #{small_model_forward.1} parent=1 // pred_fallthru
      _
    // Predicated region
    $region14: #{small_model_forward.1} parent=1 // pred_check
      _
    $region15: #{small_model_forward.1} parent=1 // pred_check_branch
      %29 = sbr.rel (0) target = $region17
    $region16: #{small_model_forward.1} parent=1 // pred_region
      _
    $region17: #{small_model_forward.1} parent=1 // pred_fallthru
      _
    // Predicated region
    $region18: #{small_model_forward.1} parent=1 // pred_check
      _
    $region19: #{small_model_forward.1} parent=1 // pred_check_branch
      %31 = sbr.rel (0) target = $region21
    $region20: #{small_model_forward.1} parent=1 // pred_region
      _
    $region21: #{small_model_forward.1} parent=1 // pred_fallthru
      _
    // Predicated region
    $region22: #{small_model_forward.1} parent=1 // pred_check
      _
    $region23: #{small_model_forward.1} parent=1 // pred_check_branch
      %33 = sbr.rel (0) target = $region25
    $region24: #{small_model_forward.1} parent=1 // pred_region
      %35 = dma.done [#allocation3], 24576
    $region25: #{small_model_forward.1} parent=1 // pred_fallthru
      _
    %v36 = vld [vmem:[#allocation2] sm:$0xf]
    %v37 = vld [vmem:[#allocation2 + $0x4] sm:$0xf]
    %v38 = vld [vmem:[#allocation2 + $0x8] sm:$0xf]
    %v39 = vld [vmem:[#allocation2 + $0xc] sm:$0xf]
    %v40 = vld [vmem:[#allocation2 + $0x10] sm:$0xf]
    %v41 = vld [vmem:[#allocation2 + $0x14] sm:$0xf]
    %v42 = vld [vmem:[#allocation2 + $0x18] sm:$0xf]
    %v43 = vld [vmem:[#allocation2 + $0x1c] sm:$0xf]
    %v44 = vld [vmem:[#allocation2 + $0x20] sm:$0xf]
    %v45 = vld [vmem:[#allocation2 + $0x24] sm:$0xf]
    %v46 = vld [vmem:[#allocation2 + $0x28] sm:$0xf]
    %v47 = vld [vmem:[#allocation2 + $0x2c] sm:$0xf]
    %v48 = vld [vmem:[#allocation2 + $0x30] sm:$0xf]
    %v49 = vld [vmem:[#allocation2 + $0x34] sm:$0xf]
    %v50 = vld [vmem:[#allocation2 + $0x38] sm:$0xf]
    %v51 = vld [vmem:[#allocation2 + $0x3c] sm:$0xf]
    %v52 = vld [vmem:[#allocation2 + $0x40] sm:$0xf]
    %v53 = vld [vmem:[#allocation2 + $0x44] sm:$0xf]
    %v54 = vld [vmem:[#allocation2 + $0x48] sm:$0xf]
    %v55 = vld [vmem:[#allocation2 + $0x4c] sm:$0xf]
    %v56 = vld [vmem:[#allocation2 + $0x50] sm:$0xf]
    %v57 = vld [vmem:[#allocation2 + $0x54] sm:$0xf]
    %v58 = vld [vmem:[#allocation2 + $0x58] sm:$0xf]
    %v59 = vld [vmem:[#allocation2 + $0x5c] sm:$0xf]
    %v60 = vld [vmem:[#allocation2 + $0x60] sm:$0xf]
    %v61 = vld [vmem:[#allocation2 + $0x64] sm:$0xf]
    %v62 = vld [vmem:[#allocation2 + $0x68] sm:$0xf]
    %v63 = vld [vmem:[#allocation2 + $0x6c] sm:$0xf]
    %v64 = vld [vmem:[#allocation2 + $0x70] sm:$0xf]
    %v65 = vld [vmem:[#allocation2 + $0x74] sm:$0xf]
    %v66 = vld [vmem:[#allocation2 + $0x78] sm:$0xf]
    %v67 = vld [vmem:[#allocation2 + $0x7c] sm:$0xf]
    %v68 = vld [vmem:[#allocation2 + $0x80] sm:$0xf]
    %v69 = vld [vmem:[#allocation2 + $0x84] sm:$0xf]
    %v70 = vld [vmem:[#allocation2 + $0x88] sm:$0xf]
    %v71 = vld [vmem:[#allocation2 + $0x8c] sm:$0xf]
    %v72 = vld [vmem:[#allocation2 + $0x90] sm:$0xf]
    %v73 = vld [vmem:[#allocation2 + $0x94] sm:$0xf]
    %v74 = vld [vmem:[#allocation2 + $0x98] sm:$0xf]
    %v75 = vld [vmem:[#allocation2 + $0x9c] sm:$0xf]
    %v76 = vld [vmem:[#allocation2 + $0xa0] sm:$0xf]
    %v77 = vld [vmem:[#allocation2 + $0xa4] sm:$0xf]
    %v78 = vld [vmem:[#allocation2 + $0xa8] sm:$0xf]
    %v79 = vld [vmem:[#allocation2 + $0xac] sm:$0xf]
    %v80 = vld [vmem:[#allocation2 + $0xb0] sm:$0xf]
    %v81 = vld [vmem:[#allocation2 + $0xb4] sm:$0xf]
    %v82 = vld [vmem:[#allocation2 + $0xb8] sm:$0xf]
    %v83 = vld [vmem:[#allocation2 + $0xbc] sm:$0xf]
    %v84 = vld [vmem:[#allocation2 + $0xc0] sm:$0xf]
    %v85 = vld [vmem:[#allocation2 + $0xc4] sm:$0xf]
    %v86 = vld [vmem:[#allocation2 + $0xc8] sm:$0xf]
    %v87 = vld [vmem:[#allocation2 + $0xcc] sm:$0xf]
    %v88 = vld [vmem:[#allocation2 + $0xd0] sm:$0xf]
    %v89 = vld [vmem:[#allocation2 + $0xd4] sm:$0xf]
    %v90 = vld [vmem:[#allocation2 + $0xd8] sm:$0xf]
    %v91 = vld [vmem:[#allocation2 + $0xdc] sm:$0xf]
    %v92 = vld [vmem:[#allocation2 + $0xe0] sm:$0xf]
    %v93 = vld [vmem:[#allocation2 + $0xe4] sm:$0xf]
    %v94 = vld [vmem:[#allocation2 + $0xe8] sm:$0xf]
    %v95 = vld [vmem:[#allocation2 + $0xec] sm:$0xf]
    %v96 = vld [vmem:[#allocation2 + $0xf0] sm:$0xf]
    %v97 = vld [vmem:[#allocation2 + $0xf4] sm:$0xf]
    %v98 = vld [vmem:[#allocation2 + $0xf8] sm:$0xf]
    %v99 = vld [vmem:[#allocation2 + $0xfc] sm:$0xf]
    %v100 = vld [vmem:[#allocation2 + $0x100] sm:$0xf]
    %v101 = vld [vmem:[#allocation2 + $0x104] sm:$0xf]
    %v102 = vld [vmem:[#allocation2 + $0x108] sm:$0xf]
    %v103 = vld [vmem:[#allocation2 + $0x10c] sm:$0xf]
    %v104 = vld [vmem:[#allocation2 + $0x110] sm:$0xf]
    %v105 = vld [vmem:[#allocation2 + $0x114] sm:$0xf]
    %v106 = vld [vmem:[#allocation2 + $0x118] sm:$0xf]
    %v107 = vld [vmem:[#allocation2 + $0x11c] sm:$0xf]
    %v108 = vld [vmem:[#allocation2 + $0x120] sm:$0xf]
    %v109 = vld [vmem:[#allocation2 + $0x124] sm:$0xf]
    %v110 = vld [vmem:[#allocation2 + $0x128] sm:$0xf]
    %v111 = vld [vmem:[#allocation2 + $0x12c] sm:$0xf]
    %v112 = vld [vmem:[#allocation2 + $0x130] sm:$0xf]
    %v113 = vld [vmem:[#allocation2 + $0x134] sm:$0xf]
    %v114 = vld [vmem:[#allocation2 + $0x138] sm:$0xf]
    %v115 = vld [vmem:[#allocation2 + $0x13c] sm:$0xf]
    %v116 = vld [vmem:[#allocation2 + $0x140] sm:$0xf]
    %v117 = vld [vmem:[#allocation2 + $0x144] sm:$0xf]
    %v118 = vld [vmem:[#allocation2 + $0x148] sm:$0xf]
    %v119 = vld [vmem:[#allocation2 + $0x14c] sm:$0xf]
    %v120 = vld [vmem:[#allocation2 + $0x150] sm:$0xf]
    %v121 = vld [vmem:[#allocation2 + $0x154] sm:$0xf]
    %v122 = vld [vmem:[#allocation2 + $0x158] sm:$0xf]
    %v123 = vld [vmem:[#allocation2 + $0x15c] sm:$0xf]
    %v124 = vld [vmem:[#allocation2 + $0x160] sm:$0xf]
    %v125 = vld [vmem:[#allocation2 + $0x164] sm:$0xf]
    %v126 = vld [vmem:[#allocation2 + $0x168] sm:$0xf]
    %v127 = vld [vmem:[#allocation2 + $0x16c] sm:$0xf]
    %v128 = vld [vmem:[#allocation2 + $0x170] sm:$0xf]
    %v129 = vld [vmem:[#allocation2 + $0x174] sm:$0xf]
    %v130 = vld [vmem:[#allocation2 + $0x178] sm:$0xf]
    %v131 = vld [vmem:[#allocation2 + $0x17c] sm:$0xf]
    %v132 = vld [vmem:[#allocation2 + $0x180] sm:$0xf]
    %v133 = vld [vmem:[#allocation2 + $0x184] sm:$0xf]
    %v134 = vld [vmem:[#allocation2 + $0x188] sm:$0xf]
    %v135 = vld [vmem:[#allocation2 + $0x18c] sm:$0xf]
    %v136 = vld [vmem:[#allocation2 + $0x190] sm:$0xf]
    %v137 = vld [vmem:[#allocation2 + $0x194] sm:$0xf]
    %v138 = vld [vmem:[#allocation2 + $0x198] sm:$0xf]
    %v139 = vld [vmem:[#allocation2 + $0x19c] sm:$0xf]
    %v140 = vld [vmem:[#allocation2 + $0x1a0] sm:$0xf]
    %v141 = vld [vmem:[#allocation2 + $0x1a4] sm:$0xf]
    %v142 = vld [vmem:[#allocation2 + $0x1a8] sm:$0xf]
    %v143 = vld [vmem:[#allocation2 + $0x1ac] sm:$0xf]
    %v144 = vld [vmem:[#allocation2 + $0x1b0] sm:$0xf]
    %v145 = vld [vmem:[#allocation2 + $0x1b4] sm:$0xf]
    %v146 = vld [vmem:[#allocation2 + $0x1b8] sm:$0xf]
    %v147 = vld [vmem:[#allocation2 + $0x1bc] sm:$0xf]
    %v148 = vld [vmem:[#allocation2 + $0x1c0] sm:$0xf]
    %v149 = vld [vmem:[#allocation2 + $0x1c4] sm:$0xf]
    %v150 = vld [vmem:[#allocation2 + $0x1c8] sm:$0xf]
    %v151 = vld [vmem:[#allocation2 + $0x1cc] sm:$0xf]
    %v152 = vld [vmem:[#allocation2 + $0x1d0] sm:$0xf]
    %v153 = vld [vmem:[#allocation2 + $0x1d4] sm:$0xf]
    %v154 = vld [vmem:[#allocation2 + $0x1d8] sm:$0xf]
    %v155 = vld [vmem:[#allocation2 + $0x1dc] sm:$0xf]
    %v156 = vld [vmem:[#allocation2 + $0x1e0] sm:$0xf]
    %v157 = vld [vmem:[#allocation2 + $0x1e4] sm:$0xf]
    %v158 = vld [vmem:[#allocation2 + $0x1e8] sm:$0xf]
    %v159 = vld [vmem:[#allocation2 + $0x1ec] sm:$0xf]
    %v160 = vld [vmem:[#allocation2 + $0x1f0] sm:$0xf]
    %v161 = vld [vmem:[#allocation2 + $0x1f4] sm:$0xf]
    %v162 = vld [vmem:[#allocation2 + $0x1f8] sm:$0xf]
    %v163 = vld [vmem:[#allocation2 + $0x1fc] sm:$0xf]
    %v164 = vld [vmem:[#allocation2 + $0x200] sm:$0xf]
    %v165 = vld [vmem:[#allocation2 + $0x204] sm:$0xf]
    %v166 = vld [vmem:[#allocation2 + $0x208] sm:$0xf]
    %v167 = vld [vmem:[#allocation2 + $0x20c] sm:$0xf]
    %v168 = vld [vmem:[#allocation2 + $0x210] sm:$0xf]
    %v169 = vld [vmem:[#allocation2 + $0x214] sm:$0xf]
    %v170 = vld [vmem:[#allocation2 + $0x218] sm:$0xf]
    %v171 = vld [vmem:[#allocation2 + $0x21c] sm:$0xf]
    %v172 = vld [vmem:[#allocation2 + $0x220] sm:$0xf]
    %v173 = vld [vmem:[#allocation2 + $0x224] sm:$0xf]
    %v174 = vld [vmem:[#allocation2 + $0x228] sm:$0xf]
    %v175 = vld [vmem:[#allocation2 + $0x22c] sm:$0xf]
    %v176 = vld [vmem:[#allocation2 + $0x230] sm:$0xf]
    %v177 = vld [vmem:[#allocation2 + $0x234] sm:$0xf]
    %v178 = vld [vmem:[#allocation2 + $0x238] sm:$0xf]
    %v179 = vld [vmem:[#allocation2 + $0x23c] sm:$0xf]
    %v180 = vld [vmem:[#allocation2 + $0x240] sm:$0xf]
    %v181 = vld [vmem:[#allocation2 + $0x244] sm:$0xf]
    %v182 = vld [vmem:[#allocation2 + $0x248] sm:$0xf]
    %v183 = vld [vmem:[#allocation2 + $0x24c] sm:$0xf]
    %v184 = vld [vmem:[#allocation2 + $0x250] sm:$0xf]
    %v185 = vld [vmem:[#allocation2 + $0x254] sm:$0xf]
    %v186 = vld [vmem:[#allocation2 + $0x258] sm:$0xf]
    %v187 = vld [vmem:[#allocation2 + $0x25c] sm:$0xf]
    %v188 = vld [vmem:[#allocation2 + $0x260] sm:$0xf]
    %v189 = vld [vmem:[#allocation2 + $0x264] sm:$0xf]
    %v190 = vld [vmem:[#allocation2 + $0x268] sm:$0xf]
    %v191 = vld [vmem:[#allocation2 + $0x26c] sm:$0xf]
    %v192 = vld [vmem:[#allocation2 + $0x270] sm:$0xf]
    %v193 = vld [vmem:[#allocation2 + $0x274] sm:$0xf]
    %v194 = vld [vmem:[#allocation2 + $0x278] sm:$0xf]
    %v195 = vld [vmem:[#allocation2 + $0x27c] sm:$0xf]
    %v196 = vld [vmem:[#allocation2 + $0x280] sm:$0xf]
    %v197 = vld [vmem:[#allocation2 + $0x284] sm:$0xf]
    %v198 = vld [vmem:[#allocation2 + $0x288] sm:$0xf]
    %v199 = vld [vmem:[#allocation2 + $0x28c] sm:$0xf]
    %v200 = vld [vmem:[#allocation2 + $0x290] sm:$0xf]
    %v201 = vld [vmem:[#allocation2 + $0x294] sm:$0xf]
    %v202 = vld [vmem:[#allocation2 + $0x298] sm:$0xf]
    %v203 = vld [vmem:[#allocation2 + $0x29c] sm:$0xf]
    %v204 = vld [vmem:[#allocation2 + $0x2a0] sm:$0xf]
    %v205 = vld [vmem:[#allocation2 + $0x2a4] sm:$0xf]
    %v206 = vld [vmem:[#allocation2 + $0x2a8] sm:$0xf]
    %v207 = vld [vmem:[#allocation2 + $0x2ac] sm:$0xf]
    %v208 = vld [vmem:[#allocation2 + $0x2b0] sm:$0xf]
    %v209 = vld [vmem:[#allocation2 + $0x2b4] sm:$0xf]
    %v210 = vld [vmem:[#allocation2 + $0x2b8] sm:$0xf]
    %v211 = vld [vmem:[#allocation2 + $0x2bc] sm:$0xf]
    %v212 = vld [vmem:[#allocation2 + $0x2c0] sm:$0xf]
    %v213 = vld [vmem:[#allocation2 + $0x2c4] sm:$0xf]
    %v214 = vld [vmem:[#allocation2 + $0x2c8] sm:$0xf]
    %v215 = vld [vmem:[#allocation2 + $0x2cc] sm:$0xf]
    %v216 = vld [vmem:[#allocation2 + $0x2d0] sm:$0xf]
    %v217 = vld [vmem:[#allocation2 + $0x2d4] sm:$0xf]
    %v218 = vld [vmem:[#allocation2 + $0x2d8] sm:$0xf]
    %v219 = vld [vmem:[#allocation2 + $0x2dc] sm:$0xf]
    %v220 = vld [vmem:[#allocation2 + $0x2e0] sm:$0xf]
    %v221 = vld [vmem:[#allocation2 + $0x2e4] sm:$0xf]
    %v222 = vld [vmem:[#allocation2 + $0x2e8] sm:$0xf]
    %v223 = vld [vmem:[#allocation2 + $0x2ec] sm:$0xf]
    %v224 = vld [vmem:[#allocation2 + $0x2f0] sm:$0xf]
    %v225 = vld [vmem:[#allocation2 + $0x2f4] sm:$0xf]
    %v226 = vld [vmem:[#allocation2 + $0x2f8] sm:$0xf]
    %v227 = vld [vmem:[#allocation2 + $0x2fc] sm:$0xf]
    %v228 = vld [vmem:[#allocation2 + $0x300] sm:$0xf]
    %v229 = vld [vmem:[#allocation2 + $0x304] sm:$0xf]
    %v230 = vld [vmem:[#allocation2 + $0x308] sm:$0xf]
    %v231 = vld [vmem:[#allocation2 + $0x30c] sm:$0xf]
    %v232 = vld [vmem:[#allocation2 + $0x310] sm:$0xf]
    %v233 = vld [vmem:[#allocation2 + $0x314] sm:$0xf]
    %v234 = vld [vmem:[#allocation2 + $0x318] sm:$0xf]
    %v235 = vld [vmem:[#allocation2 + $0x31c] sm:$0xf]
    %v236 = vld [vmem:[#allocation2 + $0x320] sm:$0xf]
    %v237 = vld [vmem:[#allocation2 + $0x324] sm:$0xf]
    %v238 = vld [vmem:[#allocation2 + $0x328] sm:$0xf]
    %v239 = vld [vmem:[#allocation2 + $0x32c] sm:$0xf]
    %v240 = vld [vmem:[#allocation2 + $0x330] sm:$0xf]
    %v241 = vld [vmem:[#allocation2 + $0x334] sm:$0xf]
    %v242 = vld [vmem:[#allocation2 + $0x338] sm:$0xf]
    %v243 = vld [vmem:[#allocation2 + $0x33c] sm:$0xf]
    %v244 = vld [vmem:[#allocation2 + $0x340] sm:$0xf]
    %v245 = vld [vmem:[#allocation2 + $0x344] sm:$0xf]
    %v246 = vld [vmem:[#allocation2 + $0x348] sm:$0xf]
    %v247 = vld [vmem:[#allocation2 + $0x34c] sm:$0xf]
    %v248 = vld [vmem:[#allocation2 + $0x350] sm:$0xf]
    %v249 = vld [vmem:[#allocation2 + $0x354] sm:$0xf]
    %v250 = vld [vmem:[#allocation2 + $0x358] sm:$0xf]
    %v251 = vld [vmem:[#allocation2 + $0x35c] sm:$0xf]
    %v252 = vld [vmem:[#allocation2 + $0x360] sm:$0xf]
    %v253 = vld [vmem:[#allocation2 + $0x364] sm:$0xf]
    %v254 = vld [vmem:[#allocation2 + $0x368] sm:$0xf]
    %v255 = vld [vmem:[#allocation2 + $0x36c] sm:$0xf]
    %v256 = vld [vmem:[#allocation2 + $0x370] sm:$0xf]
    %v257 = vld [vmem:[#allocation2 + $0x374] sm:$0xf]
    %v258 = vld [vmem:[#allocation2 + $0x378] sm:$0xf]
    %v259 = vld [vmem:[#allocation2 + $0x37c] sm:$0xf]
    %v260 = vld [vmem:[#allocation2 + $0x380] sm:$0xf]
    %v261 = vld [vmem:[#allocation2 + $0x384] sm:$0xf]
    %v262 = vld [vmem:[#allocation2 + $0x388] sm:$0xf]
    %v263 = vld [vmem:[#allocation2 + $0x38c] sm:$0xf]
    %v264 = vld [vmem:[#allocation2 + $0x390] sm:$0xf]
    %v265 = vld [vmem:[#allocation2 + $0x394] sm:$0xf]
    %v266 = vld [vmem:[#allocation2 + $0x398] sm:$0xf]
    %v267 = vld [vmem:[#allocation2 + $0x39c] sm:$0xf]
    %v268 = vld [vmem:[#allocation2 + $0x3a0] sm:$0xf]
    %v269 = vld [vmem:[#allocation2 + $0x3a4] sm:$0xf]
    %v270 = vld [vmem:[#allocation2 + $0x3a8] sm:$0xf]
    %v271 = vld [vmem:[#allocation2 + $0x3ac] sm:$0xf]
    %v272 = vld [vmem:[#allocation2 + $0x3b0] sm:$0xf]
    %v273 = vld [vmem:[#allocation2 + $0x3b4] sm:$0xf]
    %v274 = vld [vmem:[#allocation2 + $0x3b8] sm:$0xf]
    %v275 = vld [vmem:[#allocation2 + $0x3bc] sm:$0xf]
    %v276 = vld [vmem:[#allocation2 + $0x3c0] sm:$0xf]
    %v277 = vld [vmem:[#allocation2 + $0x3c4] sm:$0xf]
    %v278 = vld [vmem:[#allocation2 + $0x3c8] sm:$0xf]
    %v279 = vld [vmem:[#allocation2 + $0x3cc] sm:$0xf]
    %v280 = vld [vmem:[#allocation2 + $0x3d0] sm:$0xf]
    %v281 = vld [vmem:[#allocation2 + $0x3d4] sm:$0xf]
    %v282 = vld [vmem:[#allocation2 + $0x3d8] sm:$0xf]
    %v283 = vld [vmem:[#allocation2 + $0x3dc] sm:$0xf]
    %v284 = vld [vmem:[#allocation2 + $0x3e0] sm:$0xf]
    %v285 = vld [vmem:[#allocation2 + $0x3e4] sm:$0xf]
    %v286 = vld [vmem:[#allocation2 + $0x3e8] sm:$0xf]
    %v287 = vld [vmem:[#allocation2 + $0x3ec] sm:$0xf]
    %v288 = vld [vmem:[#allocation2 + $0x3f0] sm:$0xf]
    %v289 = vld [vmem:[#allocation2 + $0x3f4] sm:$0xf]
    %v290 = vld [vmem:[#allocation2 + $0x3f8] sm:$0xf]
    %v291 = vld [vmem:[#allocation2 + $0x3fc] sm:$0xf]
    %v292 = vld [vmem:[#allocation2 + $0x400] sm:$0xf]
    %v293 = vld [vmem:[#allocation2 + $0x404] sm:$0xf]
    %v294 = vld [vmem:[#allocation2 + $0x408] sm:$0xf]
    %v295 = vld [vmem:[#allocation2 + $0x40c] sm:$0xf]
    %v296 = vld [vmem:[#allocation2 + $0x410] sm:$0xf]
    %v297 = vld [vmem:[#allocation2 + $0x414] sm:$0xf]
    %v298 = vld [vmem:[#allocation2 + $0x418] sm:$0xf]
    %v299 = vld [vmem:[#allocation2 + $0x41c] sm:$0xf]
    %v300 = vld [vmem:[#allocation2 + $0x420] sm:$0xf]
    %v301 = vld [vmem:[#allocation2 + $0x424] sm:$0xf]
    %v302 = vld [vmem:[#allocation2 + $0x428] sm:$0xf]
    %v303 = vld [vmem:[#allocation2 + $0x42c] sm:$0xf]
    %v304 = vld [vmem:[#allocation2 + $0x430] sm:$0xf]
    %v305 = vld [vmem:[#allocation2 + $0x434] sm:$0xf]
    %v306 = vld [vmem:[#allocation2 + $0x438] sm:$0xf]
    %v307 = vld [vmem:[#allocation2 + $0x43c] sm:$0xf]
    %v308 = vld [vmem:[#allocation2 + $0x440] sm:$0xf]
    %v309 = vld [vmem:[#allocation2 + $0x444] sm:$0xf]
    %v310 = vld [vmem:[#allocation2 + $0x448] sm:$0xf]
    %v311 = vld [vmem:[#allocation2 + $0x44c] sm:$0xf]
    %v312 = vld [vmem:[#allocation2 + $0x450] sm:$0xf]
    %v313 = vld [vmem:[#allocation2 + $0x454] sm:$0xf]
    %v314 = vld [vmem:[#allocation2 + $0x458] sm:$0xf]
    %v315 = vld [vmem:[#allocation2 + $0x45c] sm:$0xf]
    %v316 = vld [vmem:[#allocation2 + $0x460] sm:$0xf]
    %v317 = vld [vmem:[#allocation2 + $0x464] sm:$0xf]
    %v318 = vld [vmem:[#allocation2 + $0x468] sm:$0xf]
    %v319 = vld [vmem:[#allocation2 + $0x46c] sm:$0xf]
    %v320 = vld [vmem:[#allocation2 + $0x470] sm:$0xf]
    %v321 = vld [vmem:[#allocation2 + $0x474] sm:$0xf]
    %v322 = vld [vmem:[#allocation2 + $0x478] sm:$0xf]
    %v323 = vld [vmem:[#allocation2 + $0x47c] sm:$0xf]
    %v324 = vld [vmem:[#allocation2 + $0x480] sm:$0xf]
    %v325 = vld [vmem:[#allocation2 + $0x484] sm:$0xf]
    %v326 = vld [vmem:[#allocation2 + $0x488] sm:$0xf]
    %v327 = vld [vmem:[#allocation2 + $0x48c] sm:$0xf]
    %v328 = vld [vmem:[#allocation2 + $0x490] sm:$0xf]
    %v329 = vld [vmem:[#allocation2 + $0x494] sm:$0xf]
    %v330 = vld [vmem:[#allocation2 + $0x498] sm:$0xf]
    %v331 = vld [vmem:[#allocation2 + $0x49c] sm:$0xf]
    %v332 = vld [vmem:[#allocation2 + $0x4a0] sm:$0xf]
    %v333 = vld [vmem:[#allocation2 + $0x4a4] sm:$0xf]
    %v334 = vld [vmem:[#allocation2 + $0x4a8] sm:$0xf]
    %v335 = vld [vmem:[#allocation2 + $0x4ac] sm:$0xf]
    %v336 = vld [vmem:[#allocation2 + $0x4b0] sm:$0xf]
    %v337 = vld [vmem:[#allocation2 + $0x4b4] sm:$0xf]
    %v338 = vld [vmem:[#allocation2 + $0x4b8] sm:$0xf]
    %v339 = vld [vmem:[#allocation2 + $0x4bc] sm:$0xf]
    %v340 = vld [vmem:[#allocation2 + $0x4c0] sm:$0xf]
    %v341 = vld [vmem:[#allocation2 + $0x4c4] sm:$0xf]
    %v342 = vld [vmem:[#allocation2 + $0x4c8] sm:$0xf]
    %v343 = vld [vmem:[#allocation2 + $0x4cc] sm:$0xf]
    %v344 = vld [vmem:[#allocation2 + $0x4d0] sm:$0xf]
    %v345 = vld [vmem:[#allocation2 + $0x4d4] sm:$0xf]
    %v346 = vld [vmem:[#allocation2 + $0x4d8] sm:$0xf]
    %v347 = vld [vmem:[#allocation2 + $0x4dc] sm:$0xf]
    %v348 = vld [vmem:[#allocation2 + $0x4e0] sm:$0xf]
    %v349 = vld [vmem:[#allocation2 + $0x4e4] sm:$0xf]
    %v350 = vld [vmem:[#allocation2 + $0x4e8] sm:$0xf]
    %v351 = vld [vmem:[#allocation2 + $0x4ec] sm:$0xf]
    %v352 = vld [vmem:[#allocation2 + $0x4f0] sm:$0xf]
    %v353 = vld [vmem:[#allocation2 + $0x4f4] sm:$0xf]
    %v354 = vld [vmem:[#allocation2 + $0x4f8] sm:$0xf]
    %v355 = vld [vmem:[#allocation2 + $0x4fc] sm:$0xf]
    %v356 = vld [vmem:[#allocation2 + $0x500] sm:$0xf]
    %v357 = vld [vmem:[#allocation2 + $0x504] sm:$0xf]
    %v358 = vld [vmem:[#allocation2 + $0x508] sm:$0xf]
    %v359 = vld [vmem:[#allocation2 + $0x50c] sm:$0xf]
    %v360 = vld [vmem:[#allocation2 + $0x510] sm:$0xf]
    %v361 = vld [vmem:[#allocation2 + $0x514] sm:$0xf]
    %v362 = vld [vmem:[#allocation2 + $0x518] sm:$0xf]
    %v363 = vld [vmem:[#allocation2 + $0x51c] sm:$0xf]
    %v364 = vld [vmem:[#allocation2 + $0x520] sm:$0xf]
    %v365 = vld [vmem:[#allocation2 + $0x524] sm:$0xf]
    %v366 = vld [vmem:[#allocation2 + $0x528] sm:$0xf]
    %v367 = vld [vmem:[#allocation2 + $0x52c] sm:$0xf]
    %v368 = vld [vmem:[#allocation2 + $0x530] sm:$0xf]
    %v369 = vld [vmem:[#allocation2 + $0x534] sm:$0xf]
    %v370 = vld [vmem:[#allocation2 + $0x538] sm:$0xf]
    %v371 = vld [vmem:[#allocation2 + $0x53c] sm:$0xf]
    %v372 = vld [vmem:[#allocation2 + $0x540] sm:$0xf]
    %v373 = vld [vmem:[#allocation2 + $0x544] sm:$0xf]
    %v374 = vld [vmem:[#allocation2 + $0x548] sm:$0xf]
    %v375 = vld [vmem:[#allocation2 + $0x54c] sm:$0xf]
    %v376 = vld [vmem:[#allocation2 + $0x550] sm:$0xf]
    %v377 = vld [vmem:[#allocation2 + $0x554] sm:$0xf]
    %v378 = vld [vmem:[#allocation2 + $0x558] sm:$0xf]
    %v379 = vld [vmem:[#allocation2 + $0x55c] sm:$0xf]
    %v380 = vld [vmem:[#allocation2 + $0x560] sm:$0xf]
    %v381 = vld [vmem:[#allocation2 + $0x564] sm:$0xf]
    %v382 = vld [vmem:[#allocation2 + $0x568] sm:$0xf]
    %v383 = vld [vmem:[#allocation2 + $0x56c] sm:$0xf]
    %v384 = vld [vmem:[#allocation2 + $0x570] sm:$0xf]
    %v385 = vld [vmem:[#allocation2 + $0x574] sm:$0xf]
    %v386 = vld [vmem:[#allocation2 + $0x578] sm:$0xf]
    %v387 = vld [vmem:[#allocation2 + $0x57c] sm:$0xf]
    %v388 = vld [vmem:[#allocation2 + $0x580] sm:$0xf]
    %v389 = vld [vmem:[#allocation2 + $0x584] sm:$0xf]
    %v390 = vld [vmem:[#allocation2 + $0x588] sm:$0xf]
    %v391 = vld [vmem:[#allocation2 + $0x58c] sm:$0xf]
    %v392 = vld [vmem:[#allocation2 + $0x590] sm:$0xf]
    %v393 = vld [vmem:[#allocation2 + $0x594] sm:$0xf]
    %v394 = vld [vmem:[#allocation2 + $0x598] sm:$0xf]
    %v395 = vld [vmem:[#allocation2 + $0x59c] sm:$0xf]
    %v396 = vld [vmem:[#allocation2 + $0x5a0] sm:$0xf]
    %v397 = vld [vmem:[#allocation2 + $0x5a4] sm:$0xf]
    %v398 = vld [vmem:[#allocation2 + $0x5a8] sm:$0xf]
    %v399 = vld [vmem:[#allocation2 + $0x5ac] sm:$0xf]
    %v400 = vld [vmem:[#allocation2 + $0x5b0] sm:$0xf]
    %v401 = vld [vmem:[#allocation2 + $0x5b4] sm:$0xf]
    %v402 = vld [vmem:[#allocation2 + $0x5b8] sm:$0xf]
    %v403 = vld [vmem:[#allocation2 + $0x5bc] sm:$0xf]
    %v404 = vld [vmem:[#allocation2 + $0x5c0] sm:$0xf]
    %v405 = vld [vmem:[#allocation2 + $0x5c4] sm:$0xf]
    %v406 = vld [vmem:[#allocation2 + $0x5c8] sm:$0xf]
    %v407 = vld [vmem:[#allocation2 + $0x5cc] sm:$0xf]
    %v408 = vld [vmem:[#allocation2 + $0x5d0] sm:$0xf]
    %v409 = vld [vmem:[#allocation2 + $0x5d4] sm:$0xf]
    %v410 = vld [vmem:[#allocation2 + $0x5d8] sm:$0xf]
    %v411 = vld [vmem:[#allocation2 + $0x5dc] sm:$0xf]
    %v412 = vld [vmem:[#allocation2 + $0x5e0] sm:$0xf]
    %v413 = vld [vmem:[#allocation2 + $0x5e4] sm:$0xf]
    %v414 = vld [vmem:[#allocation2 + $0x5e8] sm:$0xf]
    %v415 = vld [vmem:[#allocation2 + $0x5ec] sm:$0xf]
    %v416 = vld [vmem:[#allocation2 + $0x5f0] sm:$0xf]
    %v417 = vld [vmem:[#allocation2 + $0x5f4] sm:$0xf]
    %v418 = vld [vmem:[#allocation2 + $0x5f8] sm:$0xf]
    %v419 = vld [vmem:[#allocation2 + $0x5fc] sm:$0xf]
    %v420 = vunpack.c.l.bf16 %v36
    %v421 = vunpack.c.l.bf16 %v37
    %v422 = vunpack.c.l.bf16 %v38
    %v423 = vunpack.c.l.bf16 %v39
    %v424 = vunpack.c.l.bf16 %v40
    %v425 = vunpack.c.l.bf16 %v41
    %v426 = vunpack.c.l.bf16 %v42
    %v427 = vunpack.c.l.bf16 %v43
    %v428 = vunpack.c.l.bf16 %v44
    %v429 = vunpack.c.l.bf16 %v45
    %v430 = vunpack.c.l.bf16 %v46
    %v431 = vunpack.c.l.bf16 %v47
    %v432 = vunpack.c.l.bf16 %v48
    %v433 = vunpack.c.l.bf16 %v49
    %v434 = vunpack.c.l.bf16 %v50
    %v435 = vunpack.c.l.bf16 %v51
    %v436 = vunpack.c.l.bf16 %v52
    %v437 = vunpack.c.l.bf16 %v53
    %v438 = vunpack.c.l.bf16 %v54
    %v439 = vunpack.c.l.bf16 %v55
    %v440 = vunpack.c.l.bf16 %v56
    %v441 = vunpack.c.l.bf16 %v57
    %v442 = vunpack.c.l.bf16 %v58
    %v443 = vunpack.c.l.bf16 %v59
    %v444 = vunpack.c.l.bf16 %v60
    %v445 = vunpack.c.l.bf16 %v61
    %v446 = vunpack.c.l.bf16 %v62
    %v447 = vunpack.c.l.bf16 %v63
    %v448 = vunpack.c.l.bf16 %v64
    %v449 = vunpack.c.l.bf16 %v65
    %v450 = vunpack.c.l.bf16 %v66
    %v451 = vunpack.c.l.bf16 %v67
    %v452 = vunpack.c.l.bf16 %v68
    %v453 = vunpack.c.l.bf16 %v69
    %v454 = vunpack.c.l.bf16 %v70
    %v455 = vunpack.c.l.bf16 %v71
    %v456 = vunpack.c.l.bf16 %v72
    %v457 = vunpack.c.l.bf16 %v73
    %v458 = vunpack.c.l.bf16 %v74
    %v459 = vunpack.c.l.bf16 %v75
    %v460 = vunpack.c.l.bf16 %v76
    %v461 = vunpack.c.l.bf16 %v77
    %v462 = vunpack.c.l.bf16 %v78
    %v463 = vunpack.c.l.bf16 %v79
    %v464 = vunpack.c.l.bf16 %v80
    %v465 = vunpack.c.l.bf16 %v81
    %v466 = vunpack.c.l.bf16 %v82
    %v467 = vunpack.c.l.bf16 %v83
    %v468 = vunpack.c.l.bf16 %v84
    %v469 = vunpack.c.l.bf16 %v85
    %v470 = vunpack.c.l.bf16 %v86
    %v471 = vunpack.c.l.bf16 %v87
    %v472 = vunpack.c.l.bf16 %v88
    %v473 = vunpack.c.l.bf16 %v89
    %v474 = vunpack.c.l.bf16 %v90
    %v475 = vunpack.c.l.bf16 %v91
    %v476 = vunpack.c.l.bf16 %v92
    %v477 = vunpack.c.l.bf16 %v93
    %v478 = vunpack.c.l.bf16 %v94
    %v479 = vunpack.c.l.bf16 %v95
    %v480 = vunpack.c.l.bf16 %v96
    %v481 = vunpack.c.l.bf16 %v97
    %v482 = vunpack.c.l.bf16 %v98
    %v483 = vunpack.c.l.bf16 %v99
    %v484 = vunpack.c.l.bf16 %v100
    %v485 = vunpack.c.l.bf16 %v101
    %v486 = vunpack.c.l.bf16 %v102
    %v487 = vunpack.c.l.bf16 %v103
    %v488 = vunpack.c.l.bf16 %v104
    %v489 = vunpack.c.l.bf16 %v105
    %v490 = vunpack.c.l.bf16 %v106
    %v491 = vunpack.c.l.bf16 %v107
    %v492 = vunpack.c.l.bf16 %v108
    %v493 = vunpack.c.l.bf16 %v109
    %v494 = vunpack.c.l.bf16 %v110
    %v495 = vunpack.c.l.bf16 %v111
    %v496 = vunpack.c.l.bf16 %v112
    %v497 = vunpack.c.l.bf16 %v113
    %v498 = vunpack.c.l.bf16 %v114
    %v499 = vunpack.c.l.bf16 %v115
    %v500 = vunpack.c.l.bf16 %v116
    %v501 = vunpack.c.l.bf16 %v117
    %v502 = vunpack.c.l.bf16 %v118
    %v503 = vunpack.c.l.bf16 %v119
    %v504 = vunpack.c.l.bf16 %v120
    %v505 = vunpack.c.l.bf16 %v121
    %v506 = vunpack.c.l.bf16 %v122
    %v507 = vunpack.c.l.bf16 %v123
    %v508 = vunpack.c.l.bf16 %v124
    %v509 = vunpack.c.l.bf16 %v125
    %v510 = vunpack.c.l.bf16 %v126
    %v511 = vunpack.c.l.bf16 %v127
    %v512 = vunpack.c.l.bf16 %v128
    %v513 = vunpack.c.l.bf16 %v129
    %v514 = vunpack.c.l.bf16 %v130
    %v515 = vunpack.c.l.bf16 %v131
    %v516 = vunpack.c.l.bf16 %v132
    %v517 = vunpack.c.l.bf16 %v133
    %v518 = vunpack.c.l.bf16 %v134
    %v519 = vunpack.c.l.bf16 %v135
    %v520 = vunpack.c.l.bf16 %v136
    %v521 = vunpack.c.l.bf16 %v137
    %v522 = vunpack.c.l.bf16 %v138
    %v523 = vunpack.c.l.bf16 %v139
    %v524 = vunpack.c.l.bf16 %v140
    %v525 = vunpack.c.l.bf16 %v141
    %v526 = vunpack.c.l.bf16 %v142
    %v527 = vunpack.c.l.bf16 %v143
    %v528 = vunpack.c.l.bf16 %v144
    %v529 = vunpack.c.l.bf16 %v145
    %v530 = vunpack.c.l.bf16 %v146
    %v531 = vunpack.c.l.bf16 %v147
    %v532 = vunpack.c.l.bf16 %v148
    %v533 = vunpack.c.l.bf16 %v149
    %v534 = vunpack.c.l.bf16 %v150
    %v535 = vunpack.c.l.bf16 %v151
    %v536 = vunpack.c.l.bf16 %v152
    %v537 = vunpack.c.l.bf16 %v153
    %v538 = vunpack.c.l.bf16 %v154
    %v539 = vunpack.c.l.bf16 %v155
    %v540 = vunpack.c.l.bf16 %v156
    %v541 = vunpack.c.l.bf16 %v157
    %v542 = vunpack.c.l.bf16 %v158
    %v543 = vunpack.c.l.bf16 %v159
    %v544 = vunpack.c.l.bf16 %v160
    %v545 = vunpack.c.l.bf16 %v161
    %v546 = vunpack.c.l.bf16 %v162
    %v547 = vunpack.c.l.bf16 %v163
    %v548 = vunpack.c.l.bf16 %v164
    %v549 = vunpack.c.l.bf16 %v165
    %v550 = vunpack.c.l.bf16 %v166
    %v551 = vunpack.c.l.bf16 %v167
    %v552 = vunpack.c.l.bf16 %v168
    %v553 = vunpack.c.l.bf16 %v169
    %v554 = vunpack.c.l.bf16 %v170
    %v555 = vunpack.c.l.bf16 %v171
    %v556 = vunpack.c.l.bf16 %v172
    %v557 = vunpack.c.l.bf16 %v173
    %v558 = vunpack.c.l.bf16 %v174
    %v559 = vunpack.c.l.bf16 %v175
    %v560 = vunpack.c.l.bf16 %v176
    %v561 = vunpack.c.l.bf16 %v177
    %v562 = vunpack.c.l.bf16 %v178
    %v563 = vunpack.c.l.bf16 %v179
    %v564 = vunpack.c.l.bf16 %v180
    %v565 = vunpack.c.l.bf16 %v181
    %v566 = vunpack.c.l.bf16 %v182
    %v567 = vunpack.c.l.bf16 %v183
    %v568 = vunpack.c.l.bf16 %v184
    %v569 = vunpack.c.l.bf16 %v185
    %v570 = vunpack.c.l.bf16 %v186
    %v571 = vunpack.c.l.bf16 %v187
    %v572 = vunpack.c.l.bf16 %v188
    %v573 = vunpack.c.l.bf16 %v189
    %v574 = vunpack.c.l.bf16 %v190
    %v575 = vunpack.c.l.bf16 %v191
    %v576 = vunpack.c.l.bf16 %v192
    %v577 = vunpack.c.l.bf16 %v193
    %v578 = vunpack.c.l.bf16 %v194
    %v579 = vunpack.c.l.bf16 %v195
    %v580 = vunpack.c.l.bf16 %v196
    %v581 = vunpack.c.l.bf16 %v197
    %v582 = vunpack.c.l.bf16 %v198
    %v583 = vunpack.c.l.bf16 %v199
    %v584 = vunpack.c.l.bf16 %v200
    %v585 = vunpack.c.l.bf16 %v201
    %v586 = vunpack.c.l.bf16 %v202
    %v587 = vunpack.c.l.bf16 %v203
    %v588 = vunpack.c.l.bf16 %v204
    %v589 = vunpack.c.l.bf16 %v205
    %v590 = vunpack.c.l.bf16 %v206
    %v591 = vunpack.c.l.bf16 %v207
    %v592 = vunpack.c.l.bf16 %v208
    %v593 = vunpack.c.l.bf16 %v209
    %v594 = vunpack.c.l.bf16 %v210
    %v595 = vunpack.c.l.bf16 %v211
    %v596 = vunpack.c.l.bf16 %v212
    %v597 = vunpack.c.l.bf16 %v213
    %v598 = vunpack.c.l.bf16 %v214
    %v599 = vunpack.c.l.bf16 %v215
    %v600 = vunpack.c.l.bf16 %v216
    %v601 = vunpack.c.l.bf16 %v217
    %v602 = vunpack.c.l.bf16 %v218
    %v603 = vunpack.c.l.bf16 %v219
    %v604 = vunpack.c.l.bf16 %v220
    %v605 = vunpack.c.l.bf16 %v221
    %v606 = vunpack.c.l.bf16 %v222
    %v607 = vunpack.c.l.bf16 %v223
    %v608 = vunpack.c.l.bf16 %v224
    %v609 = vunpack.c.l.bf16 %v225
    %v610 = vunpack.c.l.bf16 %v226
    %v611 = vunpack.c.l.bf16 %v227
    %v612 = vunpack.c.l.bf16 %v228
    %v613 = vunpack.c.l.bf16 %v229
    %v614 = vunpack.c.l.bf16 %v230
    %v615 = vunpack.c.l.bf16 %v231
    %v616 = vunpack.c.l.bf16 %v232
    %v617 = vunpack.c.l.bf16 %v233
    %v618 = vunpack.c.l.bf16 %v234
    %v619 = vunpack.c.l.bf16 %v235
    %v620 = vunpack.c.l.bf16 %v236
    %v621 = vunpack.c.l.bf16 %v237
    %v622 = vunpack.c.l.bf16 %v238
    %v623 = vunpack.c.l.bf16 %v239
    %v624 = vunpack.c.l.bf16 %v240
    %v625 = vunpack.c.l.bf16 %v241
    %v626 = vunpack.c.l.bf16 %v242
    %v627 = vunpack.c.l.bf16 %v243
    %v628 = vunpack.c.l.bf16 %v244
    %v629 = vunpack.c.l.bf16 %v245
    %v630 = vunpack.c.l.bf16 %v246
    %v631 = vunpack.c.l.bf16 %v247
    %v632 = vunpack.c.l.bf16 %v248
    %v633 = vunpack.c.l.bf16 %v249
    %v634 = vunpack.c.l.bf16 %v250
    %v635 = vunpack.c.l.bf16 %v251
    %v636 = vunpack.c.l.bf16 %v252
    %v637 = vunpack.c.l.bf16 %v253
    %v638 = vunpack.c.l.bf16 %v254
    %v639 = vunpack.c.l.bf16 %v255
    %v640 = vunpack.c.l.bf16 %v256
    %v641 = vunpack.c.l.bf16 %v257
    %v642 = vunpack.c.l.bf16 %v258
    %v643 = vunpack.c.l.bf16 %v259
    %v644 = vunpack.c.l.bf16 %v260
    %v645 = vunpack.c.l.bf16 %v261
    %v646 = vunpack.c.l.bf16 %v262
    %v647 = vunpack.c.l.bf16 %v263
    %v648 = vunpack.c.l.bf16 %v264
    %v649 = vunpack.c.l.bf16 %v265
    %v650 = vunpack.c.l.bf16 %v266
    %v651 = vunpack.c.l.bf16 %v267
    %v652 = vunpack.c.l.bf16 %v268
    %v653 = vunpack.c.l.bf16 %v269
    %v654 = vunpack.c.l.bf16 %v270
    %v655 = vunpack.c.l.bf16 %v271
    %v656 = vunpack.c.l.bf16 %v272
    %v657 = vunpack.c.l.bf16 %v273
    %v658 = vunpack.c.l.bf16 %v274
    %v659 = vunpack.c.l.bf16 %v275
    %v660 = vunpack.c.l.bf16 %v276
    %v661 = vunpack.c.l.bf16 %v277
    %v662 = vunpack.c.l.bf16 %v278
    %v663 = vunpack.c.l.bf16 %v279
    %v664 = vunpack.c.l.bf16 %v280
    %v665 = vunpack.c.l.bf16 %v281
    %v666 = vunpack.c.l.bf16 %v282
    %v667 = vunpack.c.l.bf16 %v283
    %v668 = vunpack.c.l.bf16 %v284
    %v669 = vunpack.c.l.bf16 %v285
    %v670 = vunpack.c.l.bf16 %v286
    %v671 = vunpack.c.l.bf16 %v287
    %v672 = vunpack.c.l.bf16 %v288
    %v673 = vunpack.c.l.bf16 %v289
    %v674 = vunpack.c.l.bf16 %v290
    %v675 = vunpack.c.l.bf16 %v291
    %v676 = vunpack.c.l.bf16 %v292
    %v677 = vunpack.c.l.bf16 %v293
    %v678 = vunpack.c.l.bf16 %v294
    %v679 = vunpack.c.l.bf16 %v295
    %v680 = vunpack.c.l.bf16 %v296
    %v681 = vunpack.c.l.bf16 %v297
    %v682 = vunpack.c.l.bf16 %v298
    %v683 = vunpack.c.l.bf16 %v299
    %v684 = vunpack.c.l.bf16 %v300
    %v685 = vunpack.c.l.bf16 %v301
    %v686 = vunpack.c.l.bf16 %v302
    %v687 = vunpack.c.l.bf16 %v303
    %v688 = vunpack.c.l.bf16 %v304
    %v689 = vunpack.c.l.bf16 %v305
    %v690 = vunpack.c.l.bf16 %v306
    %v691 = vunpack.c.l.bf16 %v307
    %v692 = vunpack.c.l.bf16 %v308
    %v693 = vunpack.c.l.bf16 %v309
    %v694 = vunpack.c.l.bf16 %v310
    %v695 = vunpack.c.l.bf16 %v311
    %v696 = vunpack.c.l.bf16 %v312
    %v697 = vunpack.c.l.bf16 %v313
    %v698 = vunpack.c.l.bf16 %v314
    %v699 = vunpack.c.l.bf16 %v315
    %v700 = vunpack.c.l.bf16 %v316
    %v701 = vunpack.c.l.bf16 %v317
    %v702 = vunpack.c.l.bf16 %v318
    %v703 = vunpack.c.l.bf16 %v319
    %v704 = vunpack.c.l.bf16 %v320
    %v705 = vunpack.c.l.bf16 %v321
    %v706 = vunpack.c.l.bf16 %v322
    %v707 = vunpack.c.l.bf16 %v323
    %v708 = vunpack.c.l.bf16 %v324
    %v709 = vunpack.c.l.bf16 %v325
    %v710 = vunpack.c.l.bf16 %v326
    %v711 = vunpack.c.l.bf16 %v327
    %v712 = vunpack.c.l.bf16 %v328
    %v713 = vunpack.c.l.bf16 %v329
    %v714 = vunpack.c.l.bf16 %v330
    %v715 = vunpack.c.l.bf16 %v331
    %v716 = vunpack.c.l.bf16 %v332
    %v717 = vunpack.c.l.bf16 %v333
    %v718 = vunpack.c.l.bf16 %v334
    %v719 = vunpack.c.l.bf16 %v335
    %v720 = vunpack.c.l.bf16 %v336
    %v721 = vunpack.c.l.bf16 %v337
    %v722 = vunpack.c.l.bf16 %v338
    %v723 = vunpack.c.l.bf16 %v339
    %v724 = vunpack.c.l.bf16 %v340
    %v725 = vunpack.c.l.bf16 %v341
    %v726 = vunpack.c.l.bf16 %v342
    %v727 = vunpack.c.l.bf16 %v343
    %v728 = vunpack.c.l.bf16 %v344
    %v729 = vunpack.c.l.bf16 %v345
    %v730 = vunpack.c.l.bf16 %v346
    %v731 = vunpack.c.l.bf16 %v347
    %v732 = vunpack.c.l.bf16 %v348
    %v733 = vunpack.c.l.bf16 %v349
    %v734 = vunpack.c.l.bf16 %v350
    %v735 = vunpack.c.l.bf16 %v351
    %v736 = vunpack.c.l.bf16 %v352
    %v737 = vunpack.c.l.bf16 %v353
    %v738 = vunpack.c.l.bf16 %v354
    %v739 = vunpack.c.l.bf16 %v355
    %v740 = vunpack.c.l.bf16 %v356
    %v741 = vunpack.c.l.bf16 %v357
    %v742 = vunpack.c.l.bf16 %v358
    %v743 = vunpack.c.l.bf16 %v359
    %v744 = vunpack.c.l.bf16 %v360
    %v745 = vunpack.c.l.bf16 %v361
    %v746 = vunpack.c.l.bf16 %v362
    %v747 = vunpack.c.l.bf16 %v363
    %v748 = vunpack.c.l.bf16 %v364
    %v749 = vunpack.c.l.bf16 %v365
    %v750 = vunpack.c.l.bf16 %v366
    %v751 = vunpack.c.l.bf16 %v367
    %v752 = vunpack.c.l.bf16 %v368
    %v753 = vunpack.c.l.bf16 %v369
    %v754 = vunpack.c.l.bf16 %v370
    %v755 = vunpack.c.l.bf16 %v371
    %v756 = vunpack.c.l.bf16 %v372
    %v757 = vunpack.c.l.bf16 %v373
    %v758 = vunpack.c.l.bf16 %v374
    %v759 = vunpack.c.l.bf16 %v375
    %v760 = vunpack.c.l.bf16 %v376
    %v761 = vunpack.c.l.bf16 %v377
    %v762 = vunpack.c.l.bf16 %v378
    %v763 = vunpack.c.l.bf16 %v379
    %v764 = vunpack.c.l.bf16 %v380
    %v765 = vunpack.c.l.bf16 %v381
    %v766 = vunpack.c.l.bf16 %v382
    %v767 = vunpack.c.l.bf16 %v383
    %v768 = vunpack.c.l.bf16 %v384
    %v769 = vunpack.c.l.bf16 %v385
    %v770 = vunpack.c.l.bf16 %v386
    %v771 = vunpack.c.l.bf16 %v387
    %v772 = vunpack.c.l.bf16 %v388
    %v773 = vunpack.c.l.bf16 %v389
    %v774 = vunpack.c.l.bf16 %v390
    %v775 = vunpack.c.l.bf16 %v391
    %v776 = vunpack.c.l.bf16 %v392
    %v777 = vunpack.c.l.bf16 %v393
    %v778 = vunpack.c.l.bf16 %v394
    %v779 = vunpack.c.l.bf16 %v395
    %v780 = vunpack.c.l.bf16 %v396
    %v781 = vunpack.c.l.bf16 %v397
    %v782 = vunpack.c.l.bf16 %v398
    %v783 = vunpack.c.l.bf16 %v399
    %v784 = vunpack.c.l.bf16 %v400
    %v785 = vunpack.c.l.bf16 %v401
    %v786 = vunpack.c.l.bf16 %v402
    %v787 = vunpack.c.l.bf16 %v403
    %v788 = vunpack.c.l.bf16 %v404
    %v789 = vunpack.c.l.bf16 %v405
    %v790 = vunpack.c.l.bf16 %v406
    %v791 = vunpack.c.l.bf16 %v407
    %v792 = vunpack.c.l.bf16 %v408
    %v793 = vunpack.c.l.bf16 %v409
    %v794 = vunpack.c.l.bf16 %v410
    %v795 = vunpack.c.l.bf16 %v411
    %v796 = vunpack.c.l.bf16 %v412
    %v797 = vunpack.c.l.bf16 %v413
    %v798 = vunpack.c.l.bf16 %v414
    %v799 = vunpack.c.l.bf16 %v415
    %v800 = vunpack.c.l.bf16 %v416
    %v801 = vunpack.c.l.bf16 %v417
    %v802 = vunpack.c.l.bf16 %v418
    %v803 = vunpack.c.l.bf16 %v419
    %v804 = vld [vmem:[%s0] sm:$0xff]
    %v805 = vld [vmem:[%s0 + $0x8] sm:$0xff]
    %v806 = vld [vmem:[%s0 + $0x10] sm:$0xff]
    %v807 = vld [vmem:[%s0 + $0x18] sm:$0xff]
    %v808 = vld [vmem:[%s0 + $0x20] sm:$0xff]
    %v809 = vld [vmem:[%s0 + $0x28] sm:$0xff]
    %v810 = vld [vmem:[%s0 + $0x30] sm:$0xff]
    %v811 = vld [vmem:[%s0 + $0x38] sm:$0xff]
    %v812 = vld [vmem:[%s0 + $0x40] sm:$0xff]
    %v813 = vld [vmem:[%s0 + $0x48] sm:$0xff]
    %v814 = vld [vmem:[%s0 + $0x50] sm:$0xff]
    %v815 = vld [vmem:[%s0 + $0x58] sm:$0xff]
    %v816 = vld [vmem:[%s0 + $0x60] sm:$0xff]
    %v817 = vld [vmem:[%s0 + $0x68] sm:$0xff]
    %v818 = vld [vmem:[%s0 + $0x70] sm:$0xff]
    %v819 = vld [vmem:[%s0 + $0x78] sm:$0xff]
    %v820 = vld [vmem:[%s0 + $0x80] sm:$0xff]
    %v821 = vld [vmem:[%s0 + $0x88] sm:$0xff]
    %v822 = vld [vmem:[%s0 + $0x90] sm:$0xff]
    %v823 = vld [vmem:[%s0 + $0x98] sm:$0xff]
    %v824 = vld [vmem:[%s0 + $0xa0] sm:$0xff]
    %v825 = vld [vmem:[%s0 + $0xa8] sm:$0xff]
    %v826 = vld [vmem:[%s0 + $0xb0] sm:$0xff]
    %v827 = vld [vmem:[%s0 + $0xb8] sm:$0xff]
    %v828 = vld [vmem:[%s2] sm:$0x1]
    %v830 = vperm.slane %v828, 0
    %832 = vmatpush.msra.mxu0 %v435
    %833 = vmatpush.msra.mxu0 %v434
    %834 = vmatpush.msra.mxu0 %v433
    %835 = vmatpush.msra.mxu0 %v432
    %836 = vmatpush.msra.mxu0 %v431
    %837 = vmatpush.msra.mxu0 %v430
    %838 = vmatpush.msra.mxu0 %v429
    %839 = vmatpush.msra.mxu0 %v428
    %840 = vmatpush.msra.mxu0 %v427
    %841 = vmatpush.msra.mxu0 %v426
    %842 = vmatpush.msra.mxu0 %v425
    %843 = vmatpush.msra.mxu0 %v424
    %844 = vmatpush.msra.mxu0 %v423
    %845 = vmatpush.msra.mxu0 %v422
    %846 = vmatpush.msra.mxu0 %v421
    %847 = vmatpush.msra.mxu0 %v420
    %848 = vmatmul.f32.gmra.mxu0 %v804
    %v849 = vpop.f32.mrf.mxu0
    %v850 = vadd.f32 %v830, %v849
    %851 = vdwg.mxu0
    %852 = vmatpush.msra.mxu0 %v451
    %853 = vmatpush.msra.mxu0 %v450
    %854 = vmatpush.msra.mxu0 %v449
    %855 = vmatpush.msra.mxu0 %v448
    %856 = vmatpush.msra.mxu0 %v447
    %857 = vmatpush.msra.mxu0 %v446
    %858 = vmatpush.msra.mxu0 %v445
    %859 = vmatpush.msra.mxu0 %v444
    %860 = vmatpush.msra.mxu0 %v443
    %861 = vmatpush.msra.mxu0 %v442
    %862 = vmatpush.msra.mxu0 %v441
    %863 = vmatpush.msra.mxu0 %v440
    %864 = vmatpush.msra.mxu0 %v439
    %865 = vmatpush.msra.mxu0 %v438
    %866 = vmatpush.msra.mxu0 %v437
    %867 = vmatpush.msra.mxu0 %v436
    %868 = vmatmul.f32.gmra.mxu0 %v805
    %v869 = vpop.f32.mrf.mxu0
    %v870 = vadd.f32 %v850, %v869
    %871 = vdwg.mxu0
    %872 = vmatpush.msra.mxu0 %v467
    %873 = vmatpush.msra.mxu0 %v466
    %874 = vmatpush.msra.mxu0 %v465
    %875 = vmatpush.msra.mxu0 %v464
    %876 = vmatpush.msra.mxu0 %v463
    %877 = vmatpush.msra.mxu0 %v462
    %878 = vmatpush.msra.mxu0 %v461
    %879 = vmatpush.msra.mxu0 %v460
    %880 = vmatpush.msra.mxu0 %v459
    %881 = vmatpush.msra.mxu0 %v458
    %882 = vmatpush.msra.mxu0 %v457
    %883 = vmatpush.msra.mxu0 %v456
    %884 = vmatpush.msra.mxu0 %v455
    %885 = vmatpush.msra.mxu0 %v454
    %886 = vmatpush.msra.mxu0 %v453
    %887 = vmatpush.msra.mxu0 %v452
    %888 = vmatmul.f32.gmra.mxu0 %v806
    %v889 = vpop.f32.mrf.mxu0
    %v890 = vadd.f32 %v870, %v889
    %891 = vdwg.mxu0
    %892 = vmatpush.msra.mxu0 %v483
    %893 = vmatpush.msra.mxu0 %v482
    %894 = vmatpush.msra.mxu0 %v481
    %895 = vmatpush.msra.mxu0 %v480
    %896 = vmatpush.msra.mxu0 %v479
    %897 = vmatpush.msra.mxu0 %v478
    %898 = vmatpush.msra.mxu0 %v477
    %899 = vmatpush.msra.mxu0 %v476
    %900 = vmatpush.msra.mxu0 %v475
    %901 = vmatpush.msra.mxu0 %v474
    %902 = vmatpush.msra.mxu0 %v473
    %903 = vmatpush.msra.mxu0 %v472
    %904 = vmatpush.msra.mxu0 %v471
    %905 = vmatpush.msra.mxu0 %v470
    %906 = vmatpush.msra.mxu0 %v469
    %907 = vmatpush.msra.mxu0 %v468
    %908 = vmatmul.f32.gmra.mxu0 %v807
    %v909 = vpop.f32.mrf.mxu0
    %v910 = vadd.f32 %v890, %v909
    %911 = vdwg.mxu0
    %912 = vmatpush.msra.mxu0 %v499
    %913 = vmatpush.msra.mxu0 %v498
    %914 = vmatpush.msra.mxu0 %v497
    %915 = vmatpush.msra.mxu0 %v496
    %916 = vmatpush.msra.mxu0 %v495
    %917 = vmatpush.msra.mxu0 %v494
    %918 = vmatpush.msra.mxu0 %v493
    %919 = vmatpush.msra.mxu0 %v492
    %920 = vmatpush.msra.mxu0 %v491
    %921 = vmatpush.msra.mxu0 %v490
    %922 = vmatpush.msra.mxu0 %v489
    %923 = vmatpush.msra.mxu0 %v488
    %924 = vmatpush.msra.mxu0 %v487
    %925 = vmatpush.msra.mxu0 %v486
    %926 = vmatpush.msra.mxu0 %v485
    %927 = vmatpush.msra.mxu0 %v484
    %928 = vmatmul.f32.gmra.mxu0 %v808
    %v929 = vpop.f32.mrf.mxu0
    %v930 = vadd.f32 %v910, %v929
    %931 = vdwg.mxu0
    %932 = vmatpush.msra.mxu0 %v515
    %933 = vmatpush.msra.mxu0 %v514
    %934 = vmatpush.msra.mxu0 %v513
    %935 = vmatpush.msra.mxu0 %v512
    %936 = vmatpush.msra.mxu0 %v511
    %937 = vmatpush.msra.mxu0 %v510
    %938 = vmatpush.msra.mxu0 %v509
    %939 = vmatpush.msra.mxu0 %v508
    %940 = vmatpush.msra.mxu0 %v507
    %941 = vmatpush.msra.mxu0 %v506
    %942 = vmatpush.msra.mxu0 %v505
    %943 = vmatpush.msra.mxu0 %v504
    %944 = vmatpush.msra.mxu0 %v503
    %945 = vmatpush.msra.mxu0 %v502
    %946 = vmatpush.msra.mxu0 %v501
    %947 = vmatpush.msra.mxu0 %v500
    %948 = vmatmul.f32.gmra.mxu0 %v809
    %v949 = vpop.f32.mrf.mxu0
    %v950 = vadd.f32 %v930, %v949
    %951 = vdwg.mxu0
    %952 = vmatpush.msra.mxu0 %v531
    %953 = vmatpush.msra.mxu0 %v530
    %954 = vmatpush.msra.mxu0 %v529
    %955 = vmatpush.msra.mxu0 %v528
    %956 = vmatpush.msra.mxu0 %v527
    %957 = vmatpush.msra.mxu0 %v526
    %958 = vmatpush.msra.mxu0 %v525
    %959 = vmatpush.msra.mxu0 %v524
    %960 = vmatpush.msra.mxu0 %v523
    %961 = vmatpush.msra.mxu0 %v522
    %962 = vmatpush.msra.mxu0 %v521
    %963 = vmatpush.msra.mxu0 %v520
    %964 = vmatpush.msra.mxu0 %v519
    %965 = vmatpush.msra.mxu0 %v518
    %966 = vmatpush.msra.mxu0 %v517
    %967 = vmatpush.msra.mxu0 %v516
    %968 = vmatmul.f32.gmra.mxu0 %v810
    %v969 = vpop.f32.mrf.mxu0
    %v970 = vadd.f32 %v950, %v969
    %971 = vdwg.mxu0
    %972 = vmatpush.msra.mxu0 %v547
    %973 = vmatpush.msra.mxu0 %v546
    %974 = vmatpush.msra.mxu0 %v545
    %975 = vmatpush.msra.mxu0 %v544
    %976 = vmatpush.msra.mxu0 %v543
    %977 = vmatpush.msra.mxu0 %v542
    %978 = vmatpush.msra.mxu0 %v541
    %979 = vmatpush.msra.mxu0 %v540
    %980 = vmatpush.msra.mxu0 %v539
    %981 = vmatpush.msra.mxu0 %v538
    %982 = vmatpush.msra.mxu0 %v537
    %983 = vmatpush.msra.mxu0 %v536
    %984 = vmatpush.msra.mxu0 %v535
    %985 = vmatpush.msra.mxu0 %v534
    %986 = vmatpush.msra.mxu0 %v533
    %987 = vmatpush.msra.mxu0 %v532
    %988 = vmatmul.f32.gmra.mxu0 %v811
    %v989 = vpop.f32.mrf.mxu0
    %v990 = vadd.f32 %v970, %v989
    %991 = vdwg.mxu0
    %992 = vmatpush.msra.mxu0 %v563
    %993 = vmatpush.msra.mxu0 %v562
    %994 = vmatpush.msra.mxu0 %v561
    %995 = vmatpush.msra.mxu0 %v560
    %996 = vmatpush.msra.mxu0 %v559
    %997 = vmatpush.msra.mxu0 %v558
    %998 = vmatpush.msra.mxu0 %v557
    %999 = vmatpush.msra.mxu0 %v556
    %1000 = vmatpush.msra.mxu0 %v555
    %1001 = vmatpush.msra.mxu0 %v554
    %1002 = vmatpush.msra.mxu0 %v553
    %1003 = vmatpush.msra.mxu0 %v552
    %1004 = vmatpush.msra.mxu0 %v551
    %1005 = vmatpush.msra.mxu0 %v550
    %1006 = vmatpush.msra.mxu0 %v549
    %1007 = vmatpush.msra.mxu0 %v548
    %1008 = vmatmul.f32.gmra.mxu0 %v812
    %v1009 = vpop.f32.mrf.mxu0
    %v1010 = vadd.f32 %v990, %v1009
    %1011 = vdwg.mxu0
    %1012 = vmatpush.msra.mxu0 %v579
    %1013 = vmatpush.msra.mxu0 %v578
    %1014 = vmatpush.msra.mxu0 %v577
    %1015 = vmatpush.msra.mxu0 %v576
    %1016 = vmatpush.msra.mxu0 %v575
    %1017 = vmatpush.msra.mxu0 %v574
    %1018 = vmatpush.msra.mxu0 %v573
    %1019 = vmatpush.msra.mxu0 %v572
    %1020 = vmatpush.msra.mxu0 %v571
    %1021 = vmatpush.msra.mxu0 %v570
    %1022 = vmatpush.msra.mxu0 %v569
    %1023 = vmatpush.msra.mxu0 %v568
    %1024 = vmatpush.msra.mxu0 %v567
    %1025 = vmatpush.msra.mxu0 %v566
    %1026 = vmatpush.msra.mxu0 %v565
    %1027 = vmatpush.msra.mxu0 %v564
    %1028 = vmatmul.f32.gmra.mxu0 %v813
    %v1029 = vpop.f32.mrf.mxu0
    %v1030 = vadd.f32 %v1010, %v1029
    %1031 = vdwg.mxu0
    %1032 = vmatpush.msra.mxu0 %v595
    %1033 = vmatpush.msra.mxu0 %v594
    %1034 = vmatpush.msra.mxu0 %v593
    %1035 = vmatpush.msra.mxu0 %v592
    %1036 = vmatpush.msra.mxu0 %v591
    %1037 = vmatpush.msra.mxu0 %v590
    %1038 = vmatpush.msra.mxu0 %v589
    %1039 = vmatpush.msra.mxu0 %v588
    %1040 = vmatpush.msra.mxu0 %v587
    %1041 = vmatpush.msra.mxu0 %v586
    %1042 = vmatpush.msra.mxu0 %v585
    %1043 = vmatpush.msra.mxu0 %v584
    %1044 = vmatpush.msra.mxu0 %v583
    %1045 = vmatpush.msra.mxu0 %v582
    %1046 = vmatpush.msra.mxu0 %v581
    %1047 = vmatpush.msra.mxu0 %v580
    %1048 = vmatmul.f32.gmra.mxu0 %v814
    %v1049 = vpop.f32.mrf.mxu0
    %v1050 = vadd.f32 %v1030, %v1049
    %1051 = vdwg.mxu0
    %1052 = vmatpush.msra.mxu0 %v611
    %1053 = vmatpush.msra.mxu0 %v610
    %1054 = vmatpush.msra.mxu0 %v609
    %1055 = vmatpush.msra.mxu0 %v608
    %1056 = vmatpush.msra.mxu0 %v607
    %1057 = vmatpush.msra.mxu0 %v606
    %1058 = vmatpush.msra.mxu0 %v605
    %1059 = vmatpush.msra.mxu0 %v604
    %1060 = vmatpush.msra.mxu0 %v603
    %1061 = vmatpush.msra.mxu0 %v602
    %1062 = vmatpush.msra.mxu0 %v601
    %1063 = vmatpush.msra.mxu0 %v600
    %1064 = vmatpush.msra.mxu0 %v599
    %1065 = vmatpush.msra.mxu0 %v598
    %1066 = vmatpush.msra.mxu0 %v597
    %1067 = vmatpush.msra.mxu0 %v596
    %1068 = vmatmul.f32.gmra.mxu0 %v815
    %v1069 = vpop.f32.mrf.mxu0
    %v1070 = vadd.f32 %v1050, %v1069
    %1071 = vdwg.mxu0
    %1072 = vmatpush.msra.mxu0 %v627
    %1073 = vmatpush.msra.mxu0 %v626
    %1074 = vmatpush.msra.mxu0 %v625
    %1075 = vmatpush.msra.mxu0 %v624
    %1076 = vmatpush.msra.mxu0 %v623
    %1077 = vmatpush.msra.mxu0 %v622
    %1078 = vmatpush.msra.mxu0 %v621
    %1079 = vmatpush.msra.mxu0 %v620
    %1080 = vmatpush.msra.mxu0 %v619
    %1081 = vmatpush.msra.mxu0 %v618
    %1082 = vmatpush.msra.mxu0 %v617
    %1083 = vmatpush.msra.mxu0 %v616
    %1084 = vmatpush.msra.mxu0 %v615
    %1085 = vmatpush.msra.mxu0 %v614
    %1086 = vmatpush.msra.mxu0 %v613
    %1087 = vmatpush.msra.mxu0 %v612
    %1088 = vmatmul.f32.gmra.mxu0 %v816
    %v1089 = vpop.f32.mrf.mxu0
    %v1090 = vadd.f32 %v1070, %v1089
    %1091 = vdwg.mxu0
    %1092 = vmatpush.msra.mxu0 %v643
    %1093 = vmatpush.msra.mxu0 %v642
    %1094 = vmatpush.msra.mxu0 %v641
    %1095 = vmatpush.msra.mxu0 %v640
    %1096 = vmatpush.msra.mxu0 %v639
    %1097 = vmatpush.msra.mxu0 %v638
    %1098 = vmatpush.msra.mxu0 %v637
    %1099 = vmatpush.msra.mxu0 %v636
    %1100 = vmatpush.msra.mxu0 %v635
    %1101 = vmatpush.msra.mxu0 %v634
    %1102 = vmatpush.msra.mxu0 %v633
    %1103 = vmatpush.msra.mxu0 %v632
    %1104 = vmatpush.msra.mxu0 %v631
    %1105 = vmatpush.msra.mxu0 %v630
    %1106 = vmatpush.msra.mxu0 %v629
    %1107 = vmatpush.msra.mxu0 %v628
    %1108 = vmatmul.f32.gmra.mxu0 %v817
    %v1109 = vpop.f32.mrf.mxu0
    %v1110 = vadd.f32 %v1090, %v1109
    %1111 = vdwg.mxu0
    %1112 = vmatpush.msra.mxu0 %v659
    %1113 = vmatpush.msra.mxu0 %v658
    %1114 = vmatpush.msra.mxu0 %v657
    %1115 = vmatpush.msra.mxu0 %v656
    %1116 = vmatpush.msra.mxu0 %v655
    %1117 = vmatpush.msra.mxu0 %v654
    %1118 = vmatpush.msra.mxu0 %v653
    %1119 = vmatpush.msra.mxu0 %v652
    %1120 = vmatpush.msra.mxu0 %v651
    %1121 = vmatpush.msra.mxu0 %v650
    %1122 = vmatpush.msra.mxu0 %v649
    %1123 = vmatpush.msra.mxu0 %v648
    %1124 = vmatpush.msra.mxu0 %v647
    %1125 = vmatpush.msra.mxu0 %v646
    %1126 = vmatpush.msra.mxu0 %v645
    %1127 = vmatpush.msra.mxu0 %v644
    %1128 = vmatmul.f32.gmra.mxu0 %v818
    %v1129 = vpop.f32.mrf.mxu0
    %v1130 = vadd.f32 %v1110, %v1129
    %1131 = vdwg.mxu0
    %1132 = vmatpush.msra.mxu0 %v675
    %1133 = vmatpush.msra.mxu0 %v674
    %1134 = vmatpush.msra.mxu0 %v673
    %1135 = vmatpush.msra.mxu0 %v672
    %1136 = vmatpush.msra.mxu0 %v671
    %1137 = vmatpush.msra.mxu0 %v670
    %1138 = vmatpush.msra.mxu0 %v669
    %1139 = vmatpush.msra.mxu0 %v668
    %1140 = vmatpush.msra.mxu0 %v667
    %1141 = vmatpush.msra.mxu0 %v666
    %1142 = vmatpush.msra.mxu0 %v665
    %1143 = vmatpush.msra.mxu0 %v664
    %1144 = vmatpush.msra.mxu0 %v663
    %1145 = vmatpush.msra.mxu0 %v662
    %1146 = vmatpush.msra.mxu0 %v661
    %1147 = vmatpush.msra.mxu0 %v660
    %1148 = vmatmul.f32.gmra.mxu0 %v819
    %v1149 = vpop.f32.mrf.mxu0
    %v1150 = vadd.f32 %v1130, %v1149
    %1151 = vdwg.mxu0
    %1152 = vmatpush.msra.mxu0 %v691
    %1153 = vmatpush.msra.mxu0 %v690
    %1154 = vmatpush.msra.mxu0 %v689
    %1155 = vmatpush.msra.mxu0 %v688
    %1156 = vmatpush.msra.mxu0 %v687
    %1157 = vmatpush.msra.mxu0 %v686
    %1158 = vmatpush.msra.mxu0 %v685
    %1159 = vmatpush.msra.mxu0 %v684
    %1160 = vmatpush.msra.mxu0 %v683
    %1161 = vmatpush.msra.mxu0 %v682
    %1162 = vmatpush.msra.mxu0 %v681
    %1163 = vmatpush.msra.mxu0 %v680
    %1164 = vmatpush.msra.mxu0 %v679
    %1165 = vmatpush.msra.mxu0 %v678
    %1166 = vmatpush.msra.mxu0 %v677
    %1167 = vmatpush.msra.mxu0 %v676
    %1168 = vmatmul.f32.gmra.mxu0 %v820
    %v1169 = vpop.f32.mrf.mxu0
    %v1170 = vadd.f32 %v1150, %v1169
    %1171 = vdwg.mxu0
    %1172 = vmatpush.msra.mxu0 %v707
    %1173 = vmatpush.msra.mxu0 %v706
    %1174 = vmatpush.msra.mxu0 %v705
    %1175 = vmatpush.msra.mxu0 %v704
    %1176 = vmatpush.msra.mxu0 %v703
    %1177 = vmatpush.msra.mxu0 %v702
    %1178 = vmatpush.msra.mxu0 %v701
    %1179 = vmatpush.msra.mxu0 %v700
    %1180 = vmatpush.msra.mxu0 %v699
    %1181 = vmatpush.msra.mxu0 %v698
    %1182 = vmatpush.msra.mxu0 %v697
    %1183 = vmatpush.msra.mxu0 %v696
    %1184 = vmatpush.msra.mxu0 %v695
    %1185 = vmatpush.msra.mxu0 %v694
    %1186 = vmatpush.msra.mxu0 %v693
    %1187 = vmatpush.msra.mxu0 %v692
    %1188 = vmatmul.f32.gmra.mxu0 %v821
    %v1189 = vpop.f32.mrf.mxu0
    %v1190 = vadd.f32 %v1170, %v1189
    %1191 = vdwg.mxu0
    %1192 = vmatpush.msra.mxu0 %v723
    %1193 = vmatpush.msra.mxu0 %v722
    %1194 = vmatpush.msra.mxu0 %v721
    %1195 = vmatpush.msra.mxu0 %v720
    %1196 = vmatpush.msra.mxu0 %v719
    %1197 = vmatpush.msra.mxu0 %v718
    %1198 = vmatpush.msra.mxu0 %v717
    %1199 = vmatpush.msra.mxu0 %v716
    %1200 = vmatpush.msra.mxu0 %v715
    %1201 = vmatpush.msra.mxu0 %v714
    %1202 = vmatpush.msra.mxu0 %v713
    %1203 = vmatpush.msra.mxu0 %v712
    %1204 = vmatpush.msra.mxu0 %v711
    %1205 = vmatpush.msra.mxu0 %v710
    %1206 = vmatpush.msra.mxu0 %v709
    %1207 = vmatpush.msra.mxu0 %v708
    %1208 = vmatmul.f32.gmra.mxu0 %v822
    %v1209 = vpop.f32.mrf.mxu0
    %v1210 = vadd.f32 %v1190, %v1209
    %1211 = vdwg.mxu0
    %1212 = vmatpush.msra.mxu0 %v739
    %1213 = vmatpush.msra.mxu0 %v738
    %1214 = vmatpush.msra.mxu0 %v737
    %1215 = vmatpush.msra.mxu0 %v736
    %1216 = vmatpush.msra.mxu0 %v735
    %1217 = vmatpush.msra.mxu0 %v734
    %1218 = vmatpush.msra.mxu0 %v733
    %1219 = vmatpush.msra.mxu0 %v732
    %1220 = vmatpush.msra.mxu0 %v731
    %1221 = vmatpush.msra.mxu0 %v730
    %1222 = vmatpush.msra.mxu0 %v729
    %1223 = vmatpush.msra.mxu0 %v728
    %1224 = vmatpush.msra.mxu0 %v727
    %1225 = vmatpush.msra.mxu0 %v726
    %1226 = vmatpush.msra.mxu0 %v725
    %1227 = vmatpush.msra.mxu0 %v724
    %1228 = vmatmul.f32.gmra.mxu0 %v823
    %v1229 = vpop.f32.mrf.mxu0
    %v1230 = vadd.f32 %v1210, %v1229
    %1231 = vdwg.mxu0
    %1232 = vmatpush.msra.mxu0 %v755
    %1233 = vmatpush.msra.mxu0 %v754
    %1234 = vmatpush.msra.mxu0 %v753
    %1235 = vmatpush.msra.mxu0 %v752
    %1236 = vmatpush.msra.mxu0 %v751
    %1237 = vmatpush.msra.mxu0 %v750
    %1238 = vmatpush.msra.mxu0 %v749
    %1239 = vmatpush.msra.mxu0 %v748
    %1240 = vmatpush.msra.mxu0 %v747
    %1241 = vmatpush.msra.mxu0 %v746
    %1242 = vmatpush.msra.mxu0 %v745
    %1243 = vmatpush.msra.mxu0 %v744
    %1244 = vmatpush.msra.mxu0 %v743
    %1245 = vmatpush.msra.mxu0 %v742
    %1246 = vmatpush.msra.mxu0 %v741
    %1247 = vmatpush.msra.mxu0 %v740
    %1248 = vmatmul.f32.gmra.mxu0 %v824
    %v1249 = vpop.f32.mrf.mxu0
    %v1250 = vadd.f32 %v1230, %v1249
    %1251 = vdwg.mxu0
    %1252 = vmatpush.msra.mxu0 %v771
    %1253 = vmatpush.msra.mxu0 %v770
    %1254 = vmatpush.msra.mxu0 %v769
    %1255 = vmatpush.msra.mxu0 %v768
    %1256 = vmatpush.msra.mxu0 %v767
    %1257 = vmatpush.msra.mxu0 %v766
    %1258 = vmatpush.msra.mxu0 %v765
    %1259 = vmatpush.msra.mxu0 %v764
    %1260 = vmatpush.msra.mxu0 %v763
    %1261 = vmatpush.msra.mxu0 %v762
    %1262 = vmatpush.msra.mxu0 %v761
    %1263 = vmatpush.msra.mxu0 %v760
    %1264 = vmatpush.msra.mxu0 %v759
    %1265 = vmatpush.msra.mxu0 %v758
    %1266 = vmatpush.msra.mxu0 %v757
    %1267 = vmatpush.msra.mxu0 %v756
    %1268 = vmatmul.f32.gmra.mxu0 %v825
    %v1269 = vpop.f32.mrf.mxu0
    %v1270 = vadd.f32 %v1250, %v1269
    %1271 = vdwg.mxu0
    %1272 = vmatpush.msra.mxu0 %v787
    %1273 = vmatpush.msra.mxu0 %v786
    %1274 = vmatpush.msra.mxu0 %v785
    %1275 = vmatpush.msra.mxu0 %v784
    %1276 = vmatpush.msra.mxu0 %v783
    %1277 = vmatpush.msra.mxu0 %v782
    %1278 = vmatpush.msra.mxu0 %v781
    %1279 = vmatpush.msra.mxu0 %v780
    %1280 = vmatpush.msra.mxu0 %v779
    %1281 = vmatpush.msra.mxu0 %v778
    %1282 = vmatpush.msra.mxu0 %v777
    %1283 = vmatpush.msra.mxu0 %v776
    %1284 = vmatpush.msra.mxu0 %v775
    %1285 = vmatpush.msra.mxu0 %v774
    %1286 = vmatpush.msra.mxu0 %v773
    %1287 = vmatpush.msra.mxu0 %v772
    %1288 = vmatmul.f32.gmra.mxu0 %v826
    %v1289 = vpop.f32.mrf.mxu0
    %v1290 = vadd.f32 %v1270, %v1289
    %1291 = vdwg.mxu0
    %1292 = vmatpush.msra.mxu0 %v803
    %1293 = vmatpush.msra.mxu0 %v802
    %1294 = vmatpush.msra.mxu0 %v801
    %1295 = vmatpush.msra.mxu0 %v800
    %1296 = vmatpush.msra.mxu0 %v799
    %1297 = vmatpush.msra.mxu0 %v798
    %1298 = vmatpush.msra.mxu0 %v797
    %1299 = vmatpush.msra.mxu0 %v796
    %1300 = vmatpush.msra.mxu0 %v795
    %1301 = vmatpush.msra.mxu0 %v794
    %1302 = vmatpush.msra.mxu0 %v793
    %1303 = vmatpush.msra.mxu0 %v792
    %1304 = vmatpush.msra.mxu0 %v791
    %1305 = vmatpush.msra.mxu0 %v790
    %1306 = vmatpush.msra.mxu0 %v789
    %1307 = vmatpush.msra.mxu0 %v788
    %1308 = vmatmul.f32.gmra.mxu0 %v827
    %v1309 = vpop.f32.mrf.mxu0
    %v1310 = vadd.f32 %v1290, %v1309
    %1311 = vdwg.mxu0
    %v1312 = vmax.f32 %v1310, 0.0
    %v1313 = vld [vmem:[%s3] sm:$0xf]
    %v1314 = vld [vmem:[%s3 + $0x4] sm:$0xf]
    %v1315 = vld [vmem:[%s3 + $0x8] sm:$0xf]
    %v1316 = vld [vmem:[%s3 + $0xc] sm:$0xf]
    %v1317 = vld [vmem:[%s3 + $0x10] sm:$0xf]
    %v1318 = vld [vmem:[%s3 + $0x14] sm:$0xf]
    %v1319 = vld [vmem:[%s3 + $0x18] sm:$0xf]
    %v1320 = vld [vmem:[%s3 + $0x1c] sm:$0xf]
    %v1321 = vld [vmem:[%s3 + $0x20] sm:$0xf]
    %v1322 = vld [vmem:[%s3 + $0x24] sm:$0xf]
    %v1323 = vld [vmem:[%s3 + $0x28] sm:$0xf]
    %v1324 = vld [vmem:[%s3 + $0x2c] sm:$0xf]
    %v1325 = vld [vmem:[%s3 + $0x30] sm:$0xf]
    %v1326 = vld [vmem:[%s3 + $0x34] sm:$0xf]
    %v1327 = vld [vmem:[%s3 + $0x38] sm:$0xf]
    %v1328 = vld [vmem:[%s3 + $0x3c] sm:$0xf]
    %v1329 = vunpack.c.l.bf16 %v1313
    %v1330 = vunpack.c.l.bf16 %v1314
    %v1331 = vunpack.c.l.bf16 %v1315
    %v1332 = vunpack.c.l.bf16 %v1316
    %v1333 = vunpack.c.l.bf16 %v1317
    %v1334 = vunpack.c.l.bf16 %v1318
    %v1335 = vunpack.c.l.bf16 %v1319
    %v1336 = vunpack.c.l.bf16 %v1320
    %v1337 = vunpack.c.l.bf16 %v1321
    %v1338 = vunpack.c.l.bf16 %v1322
    %v1339 = vunpack.c.l.bf16 %v1323
    %v1340 = vunpack.c.l.bf16 %v1324
    %v1341 = vunpack.c.l.bf16 %v1325
    %v1342 = vunpack.c.l.bf16 %v1326
    %v1343 = vunpack.c.l.bf16 %v1327
    %v1344 = vunpack.c.l.bf16 %v1328
    %v1345 = vld [vmem:[%s4] sm:$0x1]
    %v1347 = vperm.slane %v1345, 0
    %1349 = vmatpush.msra.mxu0 %v1344
    %1350 = vmatpush.msra.mxu0 %v1343
    %1351 = vmatpush.msra.mxu0 %v1342
    %1352 = vmatpush.msra.mxu0 %v1341
    %1353 = vmatpush.msra.mxu0 %v1340
    %1354 = vmatpush.msra.mxu0 %v1339
    %1355 = vmatpush.msra.mxu0 %v1338
    %1356 = vmatpush.msra.mxu0 %v1337
    %1357 = vmatpush.msra.mxu0 %v1336
    %1358 = vmatpush.msra.mxu0 %v1335
    %1359 = vmatpush.msra.mxu0 %v1334
    %1360 = vmatpush.msra.mxu0 %v1333
    %1361 = vmatpush.msra.mxu0 %v1332
    %1362 = vmatpush.msra.mxu0 %v1331
    %1363 = vmatpush.msra.mxu0 %v1330
    %1364 = vmatpush.msra.mxu0 %v1329
    %1365 = vmatmul.f32.gmra.mxu0 %v1312
    %v1366 = vpop.f32.mrf.mxu0
    %v1367 = vadd.f32 %v1347, %v1366
    %1368 = vdwg.mxu0
    %1369 = vst [vmem:[%s5] sm:$0xff] %v1367
    // Predicated region
    $region26: #{small_model_forward.1} parent=1 // pred_check
      _
    $region27: #{small_model_forward.1} parent=1 // pred_check_branch
      %1371 = sbr.rel (0) target = $region29
    $region28: #{small_model_forward.1} parent=1 // pred_region
      _
    $region29: #{small_model_forward.1} parent=1 // pred_fallthru
      _
    // Predicated region
    $region30: #{small_model_forward.1} parent=1 // pred_check
      _
    $region31: #{small_model_forward.1} parent=1 // pred_check_branch
      %1373 = sbr.rel (0) target = $region33
    $region32: #{small_model_forward.1} parent=1 // pred_region
      _
    $region33: #{small_model_forward.1} parent=1 // pred_fallthru
      _
    %1374 = vsyncpa [#allocation3], 1

</llo_original>
